<compile_context>
chip_gen: v7x
topology: tpu7x:2x2x1
jax: 0.10.0
libtpu: 0.0.40
codegen_flags: <defaults>
</compile_context>

<pallas_src>
import jax
import jax.numpy as jnp
from jax.experimental import pallas as pl
from jax.experimental.pallas import tpu as pltpu

H = 64          # GRU hidden size (fixed by the module)
H2 = 2 * H      # 128: fused fwd+bwd hidden width (one full vreg of lanes)
G = 6 * H       # 384: packed gate width [r_f r_b z_f z_b n_f n_b]


def grunet_kernel(x_ref, wih_ref, whh_ref, bhn_ref, wlin_ref, blin_ref,
                  seq_ref, out_ref, gi_ref):
    Bt = out_ref.shape[0]
    T = gi_ref.shape[0] // Bt

    # ---- input projection hoisted out of the recurrence (one MXU matmul per tile) ----
    # gi columns: [r_f r_b z_f z_b n_f n_b]; all gate biases except b_hh(n) are folded in via the
    # ones column of x / extra row of wih.
    gi_ref[...] = jnp.dot(x_ref[...], wih_ref[...], preferred_element_type=jnp.float32)

    whh = whh_ref[...]                                       # (128, 384), loaded once
    bhn_b = jnp.broadcast_to(bhn_ref[...], (Bt, H2))         # hoisted: b_hh(n), must stay in r*(...)

    def step(gi, h):
        gh = jnp.dot(h, whh, preferred_element_type=jnp.float32)      # (Bt, 384)
        rz = jax.nn.sigmoid(gi[:, :4 * H] + gh[:, :4 * H])            # [r_f r_b z_f z_b]
        r = rz[:, :H2]
        z = rz[:, H2:]
        n = jnp.tanh(gi[:, 4 * H:] + r * (gh[:, 4 * H:] + bhn_b))
        return (1.0 - z) * n + z * h

    h = jnp.zeros((Bt, H2), jnp.float32)                     # [h_fwd | h_bwd]
    if T <= 32:
        # static unroll for short sequences
        for t in range(T):
            h = step(gi_ref[t * Bt:(t + 1) * Bt, :], h)
            seq_ref[t * Bt:(t + 1) * Bt, :] = h              # single unmasked 128-lane store / step
    else:
        # bounded vreg live ranges / compile time for long T
        def body(t, h):
            off = pl.multiple_of(t * Bt, Bt)
            h_new = step(gi_ref[pl.ds(off, Bt), :], h)
            seq_ref[pl.ds(off, Bt), :] = h_new
            return h_new
        h = jax.lax.fori_loop(0, T, body, h, unroll=4)

    # out = Linear(r_out[:, -1]); fwd half of time T-1 is produced at step T-1,
    # bwd half of time T-1 is produced at step 0 (step-ordered seq buffer).
    last = jnp.concatenate([seq_ref[(T - 1) * Bt:T * Bt, :H], seq_ref[0:Bt, H:]], axis=1)
    out_ref[...] = (
        jnp.dot(last, wlin_ref[...], preferred_element_type=jnp.float32) + blin_ref[...]
    )


def _pack_gates(wf_t, wb_t):
    # wf_t / wb_t: (d, 3H) with columns [r, z, n] (i.e. PyTorch weight transposed).
    # Returns (2d, 6H) with columns [r_f r_b z_f z_b n_f n_b];
    # rows 0:d act on the forward stream, rows d:2d on the backward stream.
    d = wf_t.shape[0]
    z = jnp.zeros((d, H), jnp.float32)
    top = jnp.concatenate(
        [wf_t[:, 0:H], z, wf_t[:, H:2 * H], z, wf_t[:, 2 * H:3 * H], z], axis=1)
    bot = jnp.concatenate(
        [z, wb_t[:, 0:H], z, wb_t[:, H:2 * H], z, wb_t[:, 2 * H:3 * H]], axis=1)
    return jnp.concatenate([top, bot], axis=0)


def grunet_forward(x, params):
    B, T, D = x.shape
    C = params["w_lin"].shape[0]
    K = 2 * D + 1                                # fwd feats | bwd feats | ones column (bias fold)

    # Batch tile: multiple of 8 (sublane), capped at 32 (vreg-pressure sweet spot per review).
    Bt = min(32, ((B + 7) // 8) * 8)
    Bp = ((B + Bt - 1) // Bt) * Bt
    NT = Bp // Bt

    x = x.astype(jnp.float32)
    xp = jnp.zeros((Bp, T, D), jnp.float32).at[:B].set(x)
    # Per-tile, time-major layout: (NT, T, Bt, D); row index within a tile = t*Bt + i.
    xt = jnp.transpose(xp.reshape(NT, Bt, T, D), (0, 2, 1, 3))
    x_aug = jnp.concatenate(
        [xt, xt[:, ::-1], jnp.ones((NT, T, Bt, 1), jnp.float32)], axis=-1)
    x_aug = x_aug.reshape(NT * T * Bt, K)

    # Packed weights. bgi (b_ih all gates + b_hh for r,z) is appended as the last row of wih so the
    # ones column of x_aug adds it during the projection matmul (no separate broadcast-add pass).
    wih = _pack_gates(params["w_ih_f"].T, params["w_ih_b"].T)         # (2D, 384)
    whh = _pack_gates(params["w_hh_f"].T, params["w_hh_b"].T)         # (128, 384)

    bihf, bhhf = params["b_ih_f"], params["b_hh_f"]
    bihb, bhhb = params["b_ih_b"], params["b_hh_b"]
    bgi = jnp.concatenate([
        bihf[0:H] + bhhf[0:H],           # r_f : b_ih + b_hh folded
        bihb[0:H] + bhhb[0:H],           # r_b
        bihf[H:2 * H] + bhhf[H:2 * H],   # z_f
        bihb[H:2 * H] + bhhb[H:2 * H],   # z_b
        bihf[2 * H:3 * H],               # n_f : only b_ih (b_hh_n stays inside r*(...))
        bihb[2 * H:3 * H],               # n_b
    ]).reshape(1, G)
    wih_full = jnp.concatenate([wih, bgi], axis=0)                    # (2D+1, 384)
    bhn = jnp.concatenate([bhhf[2 * H:3 * H], bhhb[2 * H:3 * H]]).reshape(1, H2)

    wlin = params["w_lin"].T                                          # (128, C)
    blin = params["b_lin"].reshape(1, C)

    # VMEM budget: per-tile gi scratch + double-buffered tile I/O + resident weights + headroom.
    gi_bytes = T * Bt * G * 4
    tile_io_bytes = T * Bt * (K + H2) * 4 + Bt * C * 4
    w_bytes = 4 * ((2 * D + 1) * G + H2 * G + H2 + H2 * C + C)
    vmem_limit = gi_bytes + 2 * tile_io_bytes + w_bytes + (4 << 20)
    vmem_limit = int(min(max(vmem_limit, 16 << 20), 64 << 20))        # cap for v7x's 64 MiB VMEM
    # TODO(synk): for very long T, stream gi in chunks (emit_pipeline / manual double buffer)
    # instead of holding the full (T*Bt, 384) scratch per tile.

    vmem_full = pl.BlockSpec(memory_space=pltpu.MemorySpace.VMEM)     # small weights, resident
    seq_flat, out_p = pl.pallas_call(
        grunet_kernel,
        out_shape=(jax.ShapeDtypeStruct((NT * T * Bt, H2), jnp.float32),
                   jax.ShapeDtypeStruct((NT * Bt, C), jnp.float32)),
        grid_spec=pltpu.PrefetchScalarGridSpec(
            num_scalar_prefetch=0,
            grid=(NT,),
            in_specs=[
                pl.BlockSpec((T * Bt, K), lambda b: (b, 0)),          # x_aug tile (pipelined)
                vmem_full, vmem_full, vmem_full, vmem_full, vmem_full,
            ],
            out_specs=(
                pl.BlockSpec((T * Bt, H2), lambda b: (b, 0)),         # step-ordered hidden states
                pl.BlockSpec((Bt, C), lambda b: (b, 0)),              # linear head output
            ),
            scratch_shapes=[pltpu.VMEM((T * Bt, G), jnp.float32)],
        ),
        compiler_params=pltpu.CompilerParams(
            dimension_semantics=("parallel",),                        # v7x: shard tiles across TCs
            vmem_limit_bytes=vmem_limit,
        ),
    )(x_aug, wih_full, whh, bhn, wlin, blin)

    # Layout plumbing only: (NT*T*Bt, 128) step-ordered -> (B, T, 2H) time-ordered.
    seq = jnp.transpose(seq_flat.reshape(NT, T, Bt, H2), (0, 2, 1, 3)).reshape(Bp, T, H2)[:B]
    # Forward half at step t is time t; backward half at step t is time T-1-t -> reverse once here.
    r_out = jnp.concatenate([seq[:, :, :H], seq[:, ::-1, H:]], axis=-1)
    out = out_p.reshape(Bp, C)[:B]
    return out, r_out


# ----- pure-JAX reference (mirrors torch.nn.GRU semantics) -----
def _ref_gru_dir(x, wih, whh, bih, bhh):
    B = x.shape[0]

    def cell(h, x_t):
        gi = x_t @ wih.T + bih
        gh = h @ whh.T + bhh
        i_r, i_z, i_n = jnp.split(gi, 3, axis=-1)
        h_r, h_z, h_n = jnp.split(gh, 3, axis=-1)
        r = jax.nn.sigmoid(i_r + h_r)
        z = jax.nn.sigmoid(i_z + h_z)
        n = jnp.tanh(i_n + r * h_n)
        h_new = (1.0 - z) * n + z * h
        return h_new, h_new

    h0 = jnp.zeros((B, H), jnp.float32)
    _, hs = jax.lax.scan(cell, h0, jnp.swapaxes(x, 0, 1))
    return jnp.swapaxes(hs, 0, 1)  # (B, T, H)


def grunet_reference(x, p):
    out_f = _ref_gru_dir(x, p["w_ih_f"], p["w_hh_f"], p["b_ih_f"], p["b_hh_f"])
    out_b = _ref_gru_dir(x[:, ::-1], p["w_ih_b"], p["w_hh_b"], p["b_ih_b"], p["b_hh_b"])[:, ::-1]
    r_out = jnp.concatenate([out_f, out_b], axis=-1)          # (B, T, 2H)
    out = r_out[:, -1] @ p["w_lin"].T + p["b_lin"]            # (B, C)
    return out, r_out


def init_params(key, input_size, out_channel):
    # torch.nn.GRU / nn.Linear default init: uniform(-1/sqrt(fan), 1/sqrt(fan))
    k_gru = 1.0 / jnp.sqrt(jnp.float32(H))
    k_lin = 1.0 / jnp.sqrt(jnp.float32(2 * H))
    keys = jax.random.split(key, 10)
    u = lambda kk, shape, bound: jax.random.uniform(kk, shape, jnp.float32, -bound, bound)
    return {
        "w_ih_f": u(keys[0], (3 * H, input_size), k_gru),
        "w_hh_f": u(keys[1], (3 * H, H), k_gru),
        "b_ih_f": u(keys[2], (3 * H,), k_gru),
        "b_hh_f": u(keys[3], (3 * H,), k_gru),
        "w_ih_b": u(keys[4], (3 * H, input_size), k_gru),
        "w_hh_b": u(keys[5], (3 * H, H), k_gru),
        "b_ih_b": u(keys[6], (3 * H,), k_gru),
        "b_hh_b": u(keys[7], (3 * H,), k_gru),
        "w_lin":  u(keys[8], (out_channel, 2 * H), k_lin),
        "b_lin":  u(keys[9], (out_channel,), k_lin),
    }


if __name__ == "__main__":
    B, T, D, C = 2, 8, 16, 1  # batch, seq len, input_size, out_channel
    key = jax.random.PRNGKey(0)
    kx, kp = jax.random.split(key)
    x = jax.random.normal(kx, (B, T, D), jnp.float32)
    params = init_params(kp, D, C)

    out, r_out = grunet_forward(x, params)
    out = jax.block_until_ready(out)
    r_out = jax.block_until_ready(r_out)

    out_ref, r_out_ref = grunet_reference(x, params)

    assert out.shape == (B, C) and out.dtype == jnp.float32
    assert r_out.shape == (B, T, 2 * H)
    assert jnp.allclose(out, out_ref, rtol=1e-4, atol=1e-4), "output mismatch vs reference"
    assert jnp.allclose(r_out, r_out_ref, rtol=1e-4, atol=1e-4), "r_out mismatch vs reference"

    # TODO(synk): predict_times_step > 1 path (Conv1d head) not implemented; module default is 1.
    print("KERNEL_OK")
</pallas_src>

<mosaic_0001>
module attributes {stable_mosaic.version = 11 : i64} {
  func.func @grunet_kernel(%arg0: i32, %arg1: memref<64x33xf32, #tpu.memory_space<vmem>>, %arg2: memref<33x384xf32, #tpu.memory_space<vmem>>, %arg3: memref<128x384xf32, #tpu.memory_space<vmem>>, %arg4: memref<1x128xf32, #tpu.memory_space<vmem>>, %arg5: memref<128x1xf32, #tpu.memory_space<vmem>>, %arg6: memref<1x1xf32, #tpu.memory_space<vmem>>, %arg7: memref<64x128xf32, #tpu.memory_space<vmem>>, %arg8: memref<8x1xf32, #tpu.memory_space<vmem>>, %arg9: memref<64x384xf32, #tpu.memory_space<vmem>>) attributes {dimension_semantics = [#tpu.dimension_semantics<parallel>], iteration_bounds = array<i64: 1>, scalar_prefetch = 0 : i64, scratch_operands = 1 : i64, tpu.core_type = #tpu.core_type<tc>, window_params = [{transform_indices = @transform_0, window_bounds = array<i64: 64, 33>}, {pipeline_mode = #tpu.pipeline_mode<synchronous>, transform_indices = @transform_1, window_bounds = array<i64: 33, 384>}, {pipeline_mode = #tpu.pipeline_mode<synchronous>, transform_indices = @transform_2, window_bounds = array<i64: 128, 384>}, {pipeline_mode = #tpu.pipeline_mode<synchronous>, transform_indices = @transform_3, window_bounds = array<i64: 1, 128>}, {pipeline_mode = #tpu.pipeline_mode<synchronous>, transform_indices = @transform_4, window_bounds = array<i64: 128, 1>}, {pipeline_mode = #tpu.pipeline_mode<synchronous>, transform_indices = @transform_5, window_bounds = array<i64: 1, 1>}, {transform_indices = @transform_6, window_bounds = array<i64: 64, 128>}, {transform_indices = @transform_7, window_bounds = array<i64: 8, 1>}]} {
    %c0 = arith.constant 0 : index
    %c0_0 = arith.constant 0 : index
    %0 = vector.load %arg1[%c0, %c0_0] : memref<64x33xf32, #tpu.memory_space<vmem>>, vector<64x33xf32>
    %c0_1 = arith.constant 0 : index
    %c0_2 = arith.constant 0 : index
    %1 = vector.load %arg2[%c0_1, %c0_2] : memref<33x384xf32, #tpu.memory_space<vmem>>, vector<33x384xf32>
    %cst = arith.constant dense<0.000000e+00> : vector<64x384xf32>
    %2 = tpu.matmul %0, %1, %cst {dimension_numbers = #tpu.dot_dimension_numbers<[1], [0], [0], [1], [0, 0, 1, 1], [], []>} : vector<64x33xf32>, vector<33x384xf32>, vector<64x384xf32> -> vector<64x384xf32>
    %c0_3 = arith.constant 0 : index
    %c0_4 = arith.constant 0 : index
    %3 = vector.load %arg9[%c0_3, %c0_4] : memref<64x384xf32, #tpu.memory_space<vmem>>, vector<64x384xf32>
    tpu.vector_store %arg9[%c0_3, %c0_4], %2 {strides = array<i32>} : memref<64x384xf32, #tpu.memory_space<vmem>>, vector<64x384xf32>,
    %c0_5 = arith.constant 0 : index
    %c0_6 = arith.constant 0 : index
    %4 = vector.load %arg3[%c0_5, %c0_6] : memref<128x384xf32, #tpu.memory_space<vmem>>, vector<128x384xf32>
    %c0_7 = arith.constant 0 : index
    %c0_8 = arith.constant 0 : index
    %5 = vector.load %arg4[%c0_7, %c0_8] : memref<1x128xf32, #tpu.memory_space<vmem>>, vector<1x128xf32>
    %6 = vector.shape_cast %5 : vector<1x128xf32> to vector<1x128xf32>
    %7 = vector.broadcast %6 : vector<1x128xf32> to vector<8x128xf32>
    %cst_9 = arith.constant 0.000000e+00 : f32
    %8 = vector.broadcast %cst_9 : f32 to vector<8x128xf32>
    %c0_10 = arith.constant 0 : index
    %c0_11 = arith.constant 0 : index
    %9 = vector.load %arg9[%c0_10, %c0_11] : memref<64x384xf32, #tpu.memory_space<vmem>>, vector<8x384xf32>
    %cst_12 = arith.constant dense<0.000000e+00> : vector<8x384xf32>
    %10 = tpu.matmul %8, %4, %cst_12 {dimension_numbers = #tpu.dot_dimension_numbers<[1], [0], [0], [1], [0, 0, 1, 1], [], []>} : vector<8x128xf32>, vector<128x384xf32>, vector<8x384xf32> -> vector<8x384xf32>
    %11 = vector.extract_strided_slice %9 {offsets = [0, 0], sizes = [8, 256], strides = [1, 1]} : vector<8x384xf32> to vector<8x256xf32>
    %12 = vector.extract_strided_slice %10 {offsets = [0, 0], sizes = [8, 256], strides = [1, 1]} : vector<8x384xf32> to vector<8x256xf32>
    %13 = arith.addf %11, %12 : vector<8x256xf32>
    %14 = arith.negf %13 : vector<8x256xf32>
    %15 = math.exp %14 : vector<8x256xf32>
    %cst_13 = arith.constant 1.000000e+00 : f32
    %16 = vector.broadcast %cst_13 : f32 to vector<8x256xf32>
    %17 = arith.addf %16, %15 : vector<8x256xf32>
    %18 = arith.divf %16, %17 : vector<8x256xf32>
    %19 = vector.extract_strided_slice %18 {offsets = [0, 0], sizes = [8, 128], strides = [1, 1]} : vector<8x256xf32> to vector<8x128xf32>
    %20 = vector.extract_strided_slice %18 {offsets = [0, 128], sizes = [8, 128], strides = [1, 1]} : vector<8x256xf32> to vector<8x128xf32>
    %21 = vector.extract_strided_slice %9 {offsets = [0, 256], sizes = [8, 128], strides = [1, 1]} : vector<8x384xf32> to vector<8x128xf32>
    %22 = vector.extract_strided_slice %10 {offsets = [0, 256], sizes = [8, 128], strides = [1, 1]} : vector<8x384xf32> to vector<8x128xf32>
    %23 = arith.addf %22, %7 : vector<8x128xf32>
    %24 = arith.mulf %19, %23 : vector<8x128xf32>
    %25 = arith.addf %21, %24 : vector<8x128xf32>
    %26 = math.tanh %25 : vector<8x128xf32>
    %cst_14 = arith.constant 1.000000e+00 : f32
    %27 = vector.broadcast %cst_14 : f32 to vector<8x128xf32>
    %28 = arith.subf %27, %20 : vector<8x128xf32>
    %29 = arith.mulf %28, %26 : vector<8x128xf32>
    %30 = arith.mulf %20, %8 : vector<8x128xf32>
    %31 = arith.addf %29, %30 : vector<8x128xf32>
    %c0_15 = arith.constant 0 : index
    %c0_16 = arith.constant 0 : index
    %32 = vector.load %arg7[%c0_15, %c0_16] : memref<64x128xf32, #tpu.memory_space<vmem>>, vector<8x128xf32>
    tpu.vector_store %arg7[%c0_15, %c0_16], %31 {strides = array<i32>} : memref<64x128xf32, #tpu.memory_space<vmem>>, vector<8x128xf32>,
    %c8 = arith.constant 8 : index
    %c0_17 = arith.constant 0 : index
    %33 = vector.load %arg9[%c8, %c0_17] : memref<64x384xf32, #tpu.memory_space<vmem>>, vector<8x384xf32>
    %cst_18 = arith.constant dense<0.000000e+00> : vector<8x384xf32>
    %34 = tpu.matmul %31, %4, %cst_18 {dimension_numbers = #tpu.dot_dimension_numbers<[1], [0], [0], [1], [0, 0, 1, 1], [], []>} : vector<8x128xf32>, vector<128x384xf32>, vector<8x384xf32> -> vector<8x384xf32>
    %35 = vector.extract_strided_slice %33 {offsets = [0, 0], sizes = [8, 256], strides = [1, 1]} : vector<8x384xf32> to vector<8x256xf32>
    %36 = vector.extract_strided_slice %34 {offsets = [0, 0], sizes = [8, 256], strides = [1, 1]} : vector<8x384xf32> to vector<8x256xf32>
    %37 = arith.addf %35, %36 : vector<8x256xf32>
    %38 = arith.negf %37 : vector<8x256xf32>
    %39 = math.exp %38 : vector<8x256xf32>
    %cst_19 = arith.constant 1.000000e+00 : f32
    %40 = vector.broadcast %cst_19 : f32 to vector<8x256xf32>
    %41 = arith.addf %40, %39 : vector<8x256xf32>
    %42 = arith.divf %40, %41 : vector<8x256xf32>
    %43 = vector.extract_strided_slice %42 {offsets = [0, 0], sizes = [8, 128], strides = [1, 1]} : vector<8x256xf32> to vector<8x128xf32>
    %44 = vector.extract_strided_slice %42 {offsets = [0, 128], sizes = [8, 128], strides = [1, 1]} : vector<8x256xf32> to vector<8x128xf32>
    %45 = vector.extract_strided_slice %33 {offsets = [0, 256], sizes = [8, 128], strides = [1, 1]} : vector<8x384xf32> to vector<8x128xf32>
    %46 = vector.extract_strided_slice %34 {offsets = [0, 256], sizes = [8, 128], strides = [1, 1]} : vector<8x384xf32> to vector<8x128xf32>
    %47 = arith.addf %46, %7 : vector<8x128xf32>
    %48 = arith.mulf %43, %47 : vector<8x128xf32>
    %49 = arith.addf %45, %48 : vector<8x128xf32>
    %50 = math.tanh %49 : vector<8x128xf32>
    %cst_20 = arith.constant 1.000000e+00 : f32
    %51 = vector.broadcast %cst_20 : f32 to vector<8x128xf32>
    %52 = arith.subf %51, %44 : vector<8x128xf32>
    %53 = arith.mulf %52, %50 : vector<8x128xf32>
    %54 = arith.mulf %44, %31 : vector<8x128xf32>
    %55 = arith.addf %53, %54 : vector<8x128xf32>
    %c8_21 = arith.constant 8 : index
    %c0_22 = arith.constant 0 : index
    %56 = vector.load %arg7[%c8_21, %c0_22] : memref<64x128xf32, #tpu.memory_space<vmem>>, vector<8x128xf32>
    tpu.vector_store %arg7[%c8_21, %c0_22], %55 {strides = array<i32>} : memref<64x128xf32, #tpu.memory_space<vmem>>, vector<8x128xf32>,
    %c16 = arith.constant 16 : index
    %c0_23 = arith.constant 0 : index
    %57 = vector.load %arg9[%c16, %c0_23] : memref<64x384xf32, #tpu.memory_space<vmem>>, vector<8x384xf32>
    %cst_24 = arith.constant dense<0.000000e+00> : vector<8x384xf32>
    %58 = tpu.matmul %55, %4, %cst_24 {dimension_numbers = #tpu.dot_dimension_numbers<[1], [0], [0], [1], [0, 0, 1, 1], [], []>} : vector<8x128xf32>, vector<128x384xf32>, vector<8x384xf32> -> vector<8x384xf32>
    %59 = vector.extract_strided_slice %57 {offsets = [0, 0], sizes = [8, 256], strides = [1, 1]} : vector<8x384xf32> to vector<8x256xf32>
    %60 = vector.extract_strided_slice %58 {offsets = [0, 0], sizes = [8, 256], strides = [1, 1]} : vector<8x384xf32> to vector<8x256xf32>
    %61 = arith.addf %59, %60 : vector<8x256xf32>
    %62 = arith.negf %61 : vector<8x256xf32>
    %63 = math.exp %62 : vector<8x256xf32>
    %cst_25 = arith.constant 1.000000e+00 : f32
    %64 = vector.broadcast %cst_25 : f32 to vector<8x256xf32>
    %65 = arith.addf %64, %63 : vector<8x256xf32>
    %66 = arith.divf %64, %65 : vector<8x256xf32>
    %67 = vector.extract_strided_slice %66 {offsets = [0, 0], sizes = [8, 128], strides = [1, 1]} : vector<8x256xf32> to vector<8x128xf32>
    %68 = vector.extract_strided_slice %66 {offsets = [0, 128], sizes = [8, 128], strides = [1, 1]} : vector<8x256xf32> to vector<8x128xf32>
    %69 = vector.extract_strided_slice %57 {offsets = [0, 256], sizes = [8, 128], strides = [1, 1]} : vector<8x384xf32> to vector<8x128xf32>
    %70 = vector.extract_strided_slice %58 {offsets = [0, 256], sizes = [8, 128], strides = [1, 1]} : vector<8x384xf32> to vector<8x128xf32>
    %71 = arith.addf %70, %7 : vector<8x128xf32>
    %72 = arith.mulf %67, %71 : vector<8x128xf32>
    %73 = arith.addf %69, %72 : vector<8x128xf32>
    %74 = math.tanh %73 : vector<8x128xf32>
    %cst_26 = arith.constant 1.000000e+00 : f32
    %75 = vector.broadcast %cst_26 : f32 to vector<8x128xf32>
    %76 = arith.subf %75, %68 : vector<8x128xf32>
    %77 = arith.mulf %76, %74 : vector<8x128xf32>
    %78 = arith.mulf %68, %55 : vector<8x128xf32>
    %79 = arith.addf %77, %78 : vector<8x128xf32>
    %c16_27 = arith.constant 16 : index
    %c0_28 = arith.constant 0 : index
    %80 = vector.load %arg7[%c16_27, %c0_28] : memref<64x128xf32, #tpu.memory_space<vmem>>, vector<8x128xf32>
    tpu.vector_store %arg7[%c16_27, %c0_28], %79 {strides = array<i32>} : memref<64x128xf32, #tpu.memory_space<vmem>>, vector<8x128xf32>,
    %c24 = arith.constant 24 : index
    %c0_29 = arith.constant 0 : index
    %81 = vector.load %arg9[%c24, %c0_29] : memref<64x384xf32, #tpu.memory_space<vmem>>, vector<8x384xf32>
    %cst_30 = arith.constant dense<0.000000e+00> : vector<8x384xf32>
    %82 = tpu.matmul %79, %4, %cst_30 {dimension_numbers = #tpu.dot_dimension_numbers<[1], [0], [0], [1], [0, 0, 1, 1], [], []>} : vector<8x128xf32>, vector<128x384xf32>, vector<8x384xf32> -> vector<8x384xf32>
    %83 = vector.extract_strided_slice %81 {offsets = [0, 0], sizes = [8, 256], strides = [1, 1]} : vector<8x384xf32> to vector<8x256xf32>
    %84 = vector.extract_strided_slice %82 {offsets = [0, 0], sizes = [8, 256], strides = [1, 1]} : vector<8x384xf32> to vector<8x256xf32>
    %85 = arith.addf %83, %84 : vector<8x256xf32>
    %86 = arith.negf %85 : vector<8x256xf32>
    %87 = math.exp %86 : vector<8x256xf32>
    %cst_31 = arith.constant 1.000000e+00 : f32
    %88 = vector.broadcast %cst_31 : f32 to vector<8x256xf32>
    %89 = arith.addf %88, %87 : vector<8x256xf32>
    %90 = arith.divf %88, %89 : vector<8x256xf32>
    %91 = vector.extract_strided_slice %90 {offsets = [0, 0], sizes = [8, 128], strides = [1, 1]} : vector<8x256xf32> to vector<8x128xf32>
    %92 = vector.extract_strided_slice %90 {offsets = [0, 128], sizes = [8, 128], strides = [1, 1]} : vector<8x256xf32> to vector<8x128xf32>
    %93 = vector.extract_strided_slice %81 {offsets = [0, 256], sizes = [8, 128], strides = [1, 1]} : vector<8x384xf32> to vector<8x128xf32>
    %94 = vector.extract_strided_slice %82 {offsets = [0, 256], sizes = [8, 128], strides = [1, 1]} : vector<8x384xf32> to vector<8x128xf32>
    %95 = arith.addf %94, %7 : vector<8x128xf32>
    %96 = arith.mulf %91, %95 : vector<8x128xf32>
    %97 = arith.addf %93, %96 : vector<8x128xf32>
    %98 = math.tanh %97 : vector<8x128xf32>
    %cst_32 = arith.constant 1.000000e+00 : f32
    %99 = vector.broadcast %cst_32 : f32 to vector<8x128xf32>
    %100 = arith.subf %99, %92 : vector<8x128xf32>
    %101 = arith.mulf %100, %98 : vector<8x128xf32>
    %102 = arith.mulf %92, %79 : vector<8x128xf32>
    %103 = arith.addf %101, %102 : vector<8x128xf32>
    %c24_33 = arith.constant 24 : index
    %c0_34 = arith.constant 0 : index
    %104 = vector.load %arg7[%c24_33, %c0_34] : memref<64x128xf32, #tpu.memory_space<vmem>>, vector<8x128xf32>
    tpu.vector_store %arg7[%c24_33, %c0_34], %103 {strides = array<i32>} : memref<64x128xf32, #tpu.memory_space<vmem>>, vector<8x128xf32>,
    %c32 = arith.constant 32 : index
    %c0_35 = arith.constant 0 : index
    %105 = vector.load %arg9[%c32, %c0_35] : memref<64x384xf32, #tpu.memory_space<vmem>>, vector<8x384xf32>
    %cst_36 = arith.constant dense<0.000000e+00> : vector<8x384xf32>
    %106 = tpu.matmul %103, %4, %cst_36 {dimension_numbers = #tpu.dot_dimension_numbers<[1], [0], [0], [1], [0, 0, 1, 1], [], []>} : vector<8x128xf32>, vector<128x384xf32>, vector<8x384xf32> -> vector<8x384xf32>
    %107 = vector.extract_strided_slice %105 {offsets = [0, 0], sizes = [8, 256], strides = [1, 1]} : vector<8x384xf32> to vector<8x256xf32>
    %108 = vector.extract_strided_slice %106 {offsets = [0, 0], sizes = [8, 256], strides = [1, 1]} : vector<8x384xf32> to vector<8x256xf32>
    %109 = arith.addf %107, %108 : vector<8x256xf32>
    %110 = arith.negf %109 : vector<8x256xf32>
    %111 = math.exp %110 : vector<8x256xf32>
    %cst_37 = arith.constant 1.000000e+00 : f32
    %112 = vector.broadcast %cst_37 : f32 to vector<8x256xf32>
    %113 = arith.addf %112, %111 : vector<8x256xf32>
    %114 = arith.divf %112, %113 : vector<8x256xf32>
    %115 = vector.extract_strided_slice %114 {offsets = [0, 0], sizes = [8, 128], strides = [1, 1]} : vector<8x256xf32> to vector<8x128xf32>
    %116 = vector.extract_strided_slice %114 {offsets = [0, 128], sizes = [8, 128], strides = [1, 1]} : vector<8x256xf32> to vector<8x128xf32>
    %117 = vector.extract_strided_slice %105 {offsets = [0, 256], sizes = [8, 128], strides = [1, 1]} : vector<8x384xf32> to vector<8x128xf32>
    %118 = vector.extract_strided_slice %106 {offsets = [0, 256], sizes = [8, 128], strides = [1, 1]} : vector<8x384xf32> to vector<8x128xf32>
    %119 = arith.addf %118, %7 : vector<8x128xf32>
    %120 = arith.mulf %115, %119 : vector<8x128xf32>
    %121 = arith.addf %117, %120 : vector<8x128xf32>
    %122 = math.tanh %121 : vector<8x128xf32>
    %cst_38 = arith.constant 1.000000e+00 : f32
    %123 = vector.broadcast %cst_38 : f32 to vector<8x128xf32>
    %124 = arith.subf %123, %116 : vector<8x128xf32>
    %125 = arith.mulf %124, %122 : vector<8x128xf32>
    %126 = arith.mulf %116, %103 : vector<8x128xf32>
    %127 = arith.addf %125, %126 : vector<8x128xf32>
    %c32_39 = arith.constant 32 : index
    %c0_40 = arith.constant 0 : index
    %128 = vector.load %arg7[%c32_39, %c0_40] : memref<64x128xf32, #tpu.memory_space<vmem>>, vector<8x128xf32>
    tpu.vector_store %arg7[%c32_39, %c0_40], %127 {strides = array<i32>} : memref<64x128xf32, #tpu.memory_space<vmem>>, vector<8x128xf32>,
    %c40 = arith.constant 40 : index
    %c0_41 = arith.constant 0 : index
    %129 = vector.load %arg9[%c40, %c0_41] : memref<64x384xf32, #tpu.memory_space<vmem>>, vector<8x384xf32>
    %cst_42 = arith.constant dense<0.000000e+00> : vector<8x384xf32>
    %130 = tpu.matmul %127, %4, %cst_42 {dimension_numbers = #tpu.dot_dimension_numbers<[1], [0], [0], [1], [0, 0, 1, 1], [], []>} : vector<8x128xf32>, vector<128x384xf32>, vector<8x384xf32> -> vector<8x384xf32>
    %131 = vector.extract_strided_slice %129 {offsets = [0, 0], sizes = [8, 256], strides = [1, 1]} : vector<8x384xf32> to vector<8x256xf32>
    %132 = vector.extract_strided_slice %130 {offsets = [0, 0], sizes = [8, 256], strides = [1, 1]} : vector<8x384xf32> to vector<8x256xf32>
    %133 = arith.addf %131, %132 : vector<8x256xf32>
    %134 = arith.negf %133 : vector<8x256xf32>
    %135 = math.exp %134 : vector<8x256xf32>
    %cst_43 = arith.constant 1.000000e+00 : f32
    %136 = vector.broadcast %cst_43 : f32 to vector<8x256xf32>
    %137 = arith.addf %136, %135 : vector<8x256xf32>
    %138 = arith.divf %136, %137 : vector<8x256xf32>
    %139 = vector.extract_strided_slice %138 {offsets = [0, 0], sizes = [8, 128], strides = [1, 1]} : vector<8x256xf32> to vector<8x128xf32>
    %140 = vector.extract_strided_slice %138 {offsets = [0, 128], sizes = [8, 128], strides = [1, 1]} : vector<8x256xf32> to vector<8x128xf32>
    %141 = vector.extract_strided_slice %129 {offsets = [0, 256], sizes = [8, 128], strides = [1, 1]} : vector<8x384xf32> to vector<8x128xf32>
    %142 = vector.extract_strided_slice %130 {offsets = [0, 256], sizes = [8, 128], strides = [1, 1]} : vector<8x384xf32> to vector<8x128xf32>
    %143 = arith.addf %142, %7 : vector<8x128xf32>
    %144 = arith.mulf %139, %143 : vector<8x128xf32>
    %145 = arith.addf %141, %144 : vector<8x128xf32>
    %146 = math.tanh %145 : vector<8x128xf32>
    %cst_44 = arith.constant 1.000000e+00 : f32
    %147 = vector.broadcast %cst_44 : f32 to vector<8x128xf32>
    %148 = arith.subf %147, %140 : vector<8x128xf32>
    %149 = arith.mulf %148, %146 : vector<8x128xf32>
    %150 = arith.mulf %140, %127 : vector<8x128xf32>
    %151 = arith.addf %149, %150 : vector<8x128xf32>
    %c40_45 = arith.constant 40 : index
    %c0_46 = arith.constant 0 : index
    %152 = vector.load %arg7[%c40_45, %c0_46] : memref<64x128xf32, #tpu.memory_space<vmem>>, vector<8x128xf32>
    tpu.vector_store %arg7[%c40_45, %c0_46], %151 {strides = array<i32>} : memref<64x128xf32, #tpu.memory_space<vmem>>, vector<8x128xf32>,
    %c48 = arith.constant 48 : index
    %c0_47 = arith.constant 0 : index
    %153 = vector.load %arg9[%c48, %c0_47] : memref<64x384xf32, #tpu.memory_space<vmem>>, vector<8x384xf32>
    %cst_48 = arith.constant dense<0.000000e+00> : vector<8x384xf32>
    %154 = tpu.matmul %151, %4, %cst_48 {dimension_numbers = #tpu.dot_dimension_numbers<[1], [0], [0], [1], [0, 0, 1, 1], [], []>} : vector<8x128xf32>, vector<128x384xf32>, vector<8x384xf32> -> vector<8x384xf32>
    %155 = vector.extract_strided_slice %153 {offsets = [0, 0], sizes = [8, 256], strides = [1, 1]} : vector<8x384xf32> to vector<8x256xf32>
    %156 = vector.extract_strided_slice %154 {offsets = [0, 0], sizes = [8, 256], strides = [1, 1]} : vector<8x384xf32> to vector<8x256xf32>
    %157 = arith.addf %155, %156 : vector<8x256xf32>
    %158 = arith.negf %157 : vector<8x256xf32>
    %159 = math.exp %158 : vector<8x256xf32>
    %cst_49 = arith.constant 1.000000e+00 : f32
    %160 = vector.broadcast %cst_49 : f32 to vector<8x256xf32>
    %161 = arith.addf %160, %159 : vector<8x256xf32>
    %162 = arith.divf %160, %161 : vector<8x256xf32>
    %163 = vector.extract_strided_slice %162 {offsets = [0, 0], sizes = [8, 128], strides = [1, 1]} : vector<8x256xf32> to vector<8x128xf32>
    %164 = vector.extract_strided_slice %162 {offsets = [0, 128], sizes = [8, 128], strides = [1, 1]} : vector<8x256xf32> to vector<8x128xf32>
    %165 = vector.extract_strided_slice %153 {offsets = [0, 256], sizes = [8, 128], strides = [1, 1]} : vector<8x384xf32> to vector<8x128xf32>
    %166 = vector.extract_strided_slice %154 {offsets = [0, 256], sizes = [8, 128], strides = [1, 1]} : vector<8x384xf32> to vector<8x128xf32>
    %167 = arith.addf %166, %7 : vector<8x128xf32>
    %168 = arith.mulf %163, %167 : vector<8x128xf32>
    %169 = arith.addf %165, %168 : vector<8x128xf32>
    %170 = math.tanh %169 : vector<8x128xf32>
    %cst_50 = arith.constant 1.000000e+00 : f32
    %171 = vector.broadcast %cst_50 : f32 to vector<8x128xf32>
    %172 = arith.subf %171, %164 : vector<8x128xf32>
    %173 = arith.mulf %172, %170 : vector<8x128xf32>
    %174 = arith.mulf %164, %151 : vector<8x128xf32>
    %175 = arith.addf %173, %174 : vector<8x128xf32>
    %c48_51 = arith.constant 48 : index
    %c0_52 = arith.constant 0 : index
    %176 = vector.load %arg7[%c48_51, %c0_52] : memref<64x128xf32, #tpu.memory_space<vmem>>, vector<8x128xf32>
    tpu.vector_store %arg7[%c48_51, %c0_52], %175 {strides = array<i32>} : memref<64x128xf32, #tpu.memory_space<vmem>>, vector<8x128xf32>,
    %c56 = arith.constant 56 : index
    %c0_53 = arith.constant 0 : index
    %177 = vector.load %arg9[%c56, %c0_53] : memref<64x384xf32, #tpu.memory_space<vmem>>, vector<8x384xf32>
    %cst_54 = arith.constant dense<0.000000e+00> : vector<8x384xf32>
    %178 = tpu.matmul %175, %4, %cst_54 {dimension_numbers = #tpu.dot_dimension_numbers<[1], [0], [0], [1], [0, 0, 1, 1], [], []>} : vector<8x128xf32>, vector<128x384xf32>, vector<8x384xf32> -> vector<8x384xf32>
    %179 = vector.extract_strided_slice %177 {offsets = [0, 0], sizes = [8, 256], strides = [1, 1]} : vector<8x384xf32> to vector<8x256xf32>
    %180 = vector.extract_strided_slice %178 {offsets = [0, 0], sizes = [8, 256], strides = [1, 1]} : vector<8x384xf32> to vector<8x256xf32>
    %181 = arith.addf %179, %180 : vector<8x256xf32>
    %182 = arith.negf %181 : vector<8x256xf32>
    %183 = math.exp %182 : vector<8x256xf32>
    %cst_55 = arith.constant 1.000000e+00 : f32
    %184 = vector.broadcast %cst_55 : f32 to vector<8x256xf32>
    %185 = arith.addf %184, %183 : vector<8x256xf32>
    %186 = arith.divf %184, %185 : vector<8x256xf32>
    %187 = vector.extract_strided_slice %186 {offsets = [0, 0], sizes = [8, 128], strides = [1, 1]} : vector<8x256xf32> to vector<8x128xf32>
    %188 = vector.extract_strided_slice %186 {offsets = [0, 128], sizes = [8, 128], strides = [1, 1]} : vector<8x256xf32> to vector<8x128xf32>
    %189 = vector.extract_strided_slice %177 {offsets = [0, 256], sizes = [8, 128], strides = [1, 1]} : vector<8x384xf32> to vector<8x128xf32>
    %190 = vector.extract_strided_slice %178 {offsets = [0, 256], sizes = [8, 128], strides = [1, 1]} : vector<8x384xf32> to vector<8x128xf32>
    %191 = arith.addf %190, %7 : vector<8x128xf32>
    %192 = arith.mulf %187, %191 : vector<8x128xf32>
    %193 = arith.addf %189, %192 : vector<8x128xf32>
    %194 = math.tanh %193 : vector<8x128xf32>
    %cst_56 = arith.constant 1.000000e+00 : f32
    %195 = vector.broadcast %cst_56 : f32 to vector<8x128xf32>
    %196 = arith.subf %195, %188 : vector<8x128xf32>
    %197 = arith.mulf %196, %194 : vector<8x128xf32>
    %198 = arith.mulf %188, %175 : vector<8x128xf32>
    %199 = arith.addf %197, %198 : vector<8x128xf32>
    %c56_57 = arith.constant 56 : index
    %c0_58 = arith.constant 0 : index
    %200 = vector.load %arg7[%c56_57, %c0_58] : memref<64x128xf32, #tpu.memory_space<vmem>>, vector<8x128xf32>
    tpu.vector_store %arg7[%c56_57, %c0_58], %199 {strides = array<i32>} : memref<64x128xf32, #tpu.memory_space<vmem>>, vector<8x128xf32>,
    %c56_59 = arith.constant 56 : index
    %c0_60 = arith.constant 0 : index
    %201 = vector.load %arg7[%c56_59, %c0_60] : memref<64x128xf32, #tpu.memory_space<vmem>>, vector<8x64xf32>
    %c0_61 = arith.constant 0 : index
    %c64 = arith.constant 64 : index
    %202 = vector.load %arg7[%c0_61, %c64] : memref<64x128xf32, #tpu.memory_space<vmem>>, vector<8x64xf32>
    %203 = tpu.concatenate %201, %202 in 1 : vector<8x64xf32>, vector<8x64xf32> -> vector<8x128xf32>
    %c0_62 = arith.constant 0 : index
    %c0_63 = arith.constant 0 : index
    %204 = vector.load %arg5[%c0_62, %c0_63] : memref<128x1xf32, #tpu.memory_space<vmem>>, vector<128x1xf32>
    %cst_64 = arith.constant dense<0.000000e+00> : vector<8x1xf32>
    %205 = tpu.matmul %203, %204, %cst_64 {dimension_numbers = #tpu.dot_dimension_numbers<[1], [0], [0], [1], [0, 0, 1, 1], [], []>} : vector<8x128xf32>, vector<128x1xf32>, vector<8x1xf32> -> vector<8x1xf32>
    %c0_65 = arith.constant 0 : index
    %c0_66 = arith.constant 0 : index
    %206 = vector.load %arg6[%c0_65, %c0_66] : memref<1x1xf32, #tpu.memory_space<vmem>>, vector<1x1xf32>
    %207 = vector.broadcast %206 : vector<1x1xf32> to vector<8x1xf32>
    %208 = arith.addf %205, %207 : vector<8x1xf32>
    %c0_67 = arith.constant 0 : index
    %c0_68 = arith.constant 0 : index
    %209 = vector.load %arg8[%c0_67, %c0_68] : memref<8x1xf32, #tpu.memory_space<vmem>>, vector<8x1xf32>
    tpu.vector_store %arg8[%c0_67, %c0_68], %208 {strides = array<i32>} : memref<8x1xf32, #tpu.memory_space<vmem>>, vector<8x1xf32>,
    return
  }
  func.func @transform_0(%arg0: i32) -> (i32, i32) {
    %c0_i32 = arith.constant 0 : i32
    %c0_i32_0 = arith.constant 0 : i32
    return %arg0, %c0_i32 : i32, i32
  }
  func.func @transform_1(%arg0: i32) -> (i32, i32) {
    %c0_i32 = arith.constant 0 : i32
    %c0_i32_0 = arith.constant 0 : i32
    %c0_i32_1 = arith.constant 0 : i32
    return %c0_i32, %c0_i32_0 : i32, i32
  }
  func.func @transform_2(%arg0: i32) -> (i32, i32) {
    %c0_i32 = arith.constant 0 : i32
    %c0_i32_0 = arith.constant 0 : i32
    %c0_i32_1 = arith.constant 0 : i32
    return %c0_i32, %c0_i32_0 : i32, i32
  }
  func.func @transform_3(%arg0: i32) -> (i32, i32) {
    %c0_i32 = arith.constant 0 : i32
    %c0_i32_0 = arith.constant 0 : i32
    %c0_i32_1 = arith.constant 0 : i32
    return %c0_i32, %c0_i32_0 : i32, i32
  }
  func.func @transform_4(%arg0: i32) -> (i32, i32) {
    %c0_i32 = arith.constant 0 : i32
    %c0_i32_0 = arith.constant 0 : i32
    %c0_i32_1 = arith.constant 0 : i32
    return %c0_i32, %c0_i32_0 : i32, i32
  }
  func.func @transform_5(%arg0: i32) -> (i32, i32) {
    %c0_i32 = arith.constant 0 : i32
    %c0_i32_0 = arith.constant 0 : i32
    %c0_i32_1 = arith.constant 0 : i32
    return %c0_i32, %c0_i32_0 : i32, i32
  }
  func.func @transform_6(%arg0: i32) -> (i32, i32) {
    %c0_i32 = arith.constant 0 : i32
    %c0_i32_0 = arith.constant 0 : i32
    return %arg0, %c0_i32 : i32, i32
  }
  func.func @transform_7(%arg0: i32) -> (i32, i32) {
    %c0_i32 = arith.constant 0 : i32
    %c0_i32_0 = arith.constant 0 : i32
    return %arg0, %c0_i32 : i32, i32
  }
}

</mosaic_0001>

<llo_original>
// kernel: tpu_custom_call.1
$region0: #{tpu_custom_call.1}
  #allocation0 [shape = 'u32[]', space=smem, size = 0x4, offset = 0x4, fixed_abs, tag = 'smem constant byte address 0x4 - core index']
  #allocation1 [shape = 'u32[144,128]{1,0:T(1,128)}', space=vmem, size = 0x12000, scoped, tag = 'internal scratch']
  #allocation2 [shape = 'f32[64,384]{1,0:T(8,128)}', space=vmem, size = 0x18000, scoped, tag = 'scratch operand']
  #allocation3 [shape = 'f32[1,1]{1,0:T(1,128)S(1)}', space=vmem, size = 0x200, scoped, tag = 'scoped memory for tpu_custom_call.1']
  %s0 = inlined_call_operand.vmem [shape: f32[64,33], index: 0, kind: input, shape index: {}]
  %s1 = inlined_call_operand.vmem [shape: f32[33,384], index: 1, kind: input, shape index: {}]
  %s2 = inlined_call_operand.hbm [shape: f32[128,384], index: 2, kind: input, shape index: {}]
  %s3 = inlined_call_operand.vmem [shape: f32[1,128], index: 3, kind: input, shape index: {}]
  %s4 = inlined_call_operand.vmem [shape: f32[128,1], index: 4, kind: input, shape index: {}]
  %s5 = inlined_call_operand.<no memory space> [shape: f32[1,1], index: 5, kind: input, shape index: {}]
  %s6 = inlined_call_operand.hbm [shape: f32[64,128], index: 6, kind: output, shape index: {0}]
  %s7 = inlined_call_operand.vmem [shape: f32[8,1], index: 7, kind: output, shape index: {1}]
  %8 = xla_tuple %s6, %s7
  %s9 = sld [smem:[#allocation0]]
  $region46: #{tpu_custom_call.1} parent=0
    _
  %s11 = ssub.s32 1, %s9
  %s12 = scalar_select 0, %s11, %s9
  %v13 = vstv %s5
  %14 = vst [vmem:[#allocation3] sm:$0x1] %v13
  $region1: #{tpu_custom_call.1} parent=0
    #allocation4 [shape = 'u8[196608]{0}', space=vmem, size = 0x30000, scoped, tag = 'input window, operand 2, single buffered']
    #allocation5 [shape = 's32[1]{0}', space=sflag, size = 0x4, scoped, tag = 'scoped memory for tpu_custom_call.1']
    #allocation6 [shape = 's32[1]{0}', space=sflag, size = 0x4, scoped, tag = 'scoped memory for tpu_custom_call.1']
    #allocation7 [shape = 'u8[32768]{0}', space=vmem, size = 0x8000, scoped, tag = 'output window, operand 0, single buffered']
    %15 = vsyncpa [#allocation5], 0
    %16 = vsyncpa [#allocation6], 0
    // Predicated region
    $region2: #{tpu_custom_call.1} parent=1 // pred_check
      _
    $region3: #{tpu_custom_call.1} parent=1 // pred_check_branch
      %18 = sbr.rel (0) target = $region5
    $region4: #{tpu_custom_call.1} parent=1 // pred_region
      _
    $region5: #{tpu_custom_call.1} parent=1 // pred_fallthru
      _
    // Predicated region
    $region6: #{tpu_custom_call.1} parent=1 // pred_check
      _
    $region7: #{tpu_custom_call.1} parent=1 // pred_check_branch
      %20 = sbr.rel (0) target = $region9
    $region8: #{tpu_custom_call.1} parent=1 // pred_region
      _
    $region9: #{tpu_custom_call.1} parent=1 // pred_fallthru
      _
    // Predicated region
    $region10: #{tpu_custom_call.1} parent=1 // pred_check
      _
    $region11: #{tpu_custom_call.1} parent=1 // pred_check_branch
      %22 = sbr.rel (0) target = $region13
    $region12: #{tpu_custom_call.1} parent=1 // pred_region
      %s24 = ssub.s32 6144, 6144
      %25 = vsyncadd [#allocation5], %s24
      %s26 = sshll.u32 [#allocation4], 4
      %s27 = int_to_ptr.vmem [resolvable:$true] %s26
      %32 = dma.hbm_to_vmem [thread:$0]  %s2, 6144, %s27, [#allocation5], 384, 384, 24
    $region13: #{tpu_custom_call.1} parent=1 // pred_fallthru
      _
    // Predicated region
    $region14: #{tpu_custom_call.1} parent=1 // pred_check
      _
    $region15: #{tpu_custom_call.1} parent=1 // pred_check_branch
      %34 = sbr.rel (0) target = $region17
    $region16: #{tpu_custom_call.1} parent=1 // pred_region
      _
    $region17: #{tpu_custom_call.1} parent=1 // pred_fallthru
      _
    // Predicated region
    $region18: #{tpu_custom_call.1} parent=1 // pred_check
      _
    $region19: #{tpu_custom_call.1} parent=1 // pred_check_branch
      %36 = sbr.rel (0) target = $region21
    $region20: #{tpu_custom_call.1} parent=1 // pred_region
      _
    $region21: #{tpu_custom_call.1} parent=1 // pred_fallthru
      _
    // Predicated region
    $region22: #{tpu_custom_call.1} parent=1 // pred_check
      _
    $region23: #{tpu_custom_call.1} parent=1 // pred_check_branch
      %38 = sbr.rel (0) target = $region25
    $region24: #{tpu_custom_call.1} parent=1 // pred_region
      _
    $region25: #{tpu_custom_call.1} parent=1 // pred_fallthru
      _
    // Predicated region
    $region26: #{tpu_custom_call.1} parent=1 // pred_check
      _
    $region27: #{tpu_custom_call.1} parent=1 // pred_check_branch
      %40 = sbr.rel (0) target = $region29
    $region28: #{tpu_custom_call.1} parent=1 // pred_region
      %41 = dma.done [#allocation5], 6144
    $region29: #{tpu_custom_call.1} parent=1 // pred_fallthru
      _
    %v42 = vld [vmem:[%s0] sm:$0xff]
    %v43 = vld [vmem:[%s0 + $0x8] sm:$0xff]
    %v44 = vld [vmem:[%s0 + $0x10] sm:$0xff]
    %v45 = vld [vmem:[%s0 + $0x18] sm:$0xff]
    %v46 = vld [vmem:[%s0 + $0x20] sm:$0xff]
    %v47 = vld [vmem:[%s0 + $0x28] sm:$0xff]
    %v48 = vld [vmem:[%s0 + $0x30] sm:$0xff]
    %v49 = vld [vmem:[%s0 + $0x38] sm:$0xff]
    %v50 = vld [vmem:[%s1] sm:$0xff]
    %v51 = vld [vmem:[%s1 + $0x8] sm:$0xff]
    %v52 = vld [vmem:[%s1 + $0x10] sm:$0xff]
    %v53 = vld [vmem:[%s1 + $0x18] sm:$0xff]
    %v54 = vld [vmem:[%s1 + $0x20] sm:$0xff]
    %v55 = vld [vmem:[%s1 + $0x28] sm:$0xff]
    %v56 = vld [vmem:[%s1 + $0x30] sm:$0xff]
    %v57 = vld [vmem:[%s1 + $0x38] sm:$0xff]
    %v58 = vld [vmem:[%s1 + $0x40] sm:$0xff]
    %v59 = vld [vmem:[%s1 + $0x48] sm:$0xff]
    %v60 = vld [vmem:[%s1 + $0x50] sm:$0xff]
    %v61 = vld [vmem:[%s1 + $0x58] sm:$0xff]
    %v62 = vld [vmem:[%s1 + $0x60] sm:$0x1]
    %v63 = vld [vmem:[%s1 + $0x68] sm:$0x1]
    %v64 = vld [vmem:[%s1 + $0x70] sm:$0x1]
    %vm65 = vcmask 269312
    %v67 = vsel %vm65, %v42, 0
    %v70 = vsel %vm65, %v43, 0
    %v73 = vsel %vm65, %v44, 0
    %v76 = vsel %vm65, %v45, 0
    %v79 = vsel %vm65, %v46, 0
    %v82 = vsel %vm65, %v47, 0
    %v85 = vsel %vm65, %v48, 0
    %v88 = vsel %vm65, %v49, 0
    %vm90 = vcmask 1040384
    %v92 = vsel %vm90, %v62, 0
    %v95 = vsel %vm90, %v63, 0
    %v98 = vsel %vm90, %v64, 0
    %100 = vmatprep.subr.mxu0 %v51
    %101 = vmatpush1.msra.mxu0 %v50
    %102 = vmatprep.subr.mxu0 %v54
    %103 = vmatpush1.msra.mxu0 %v53
    %104 = vmatprep.subr.mxu0 %v57
    %105 = vmatpush1.msra.mxu0 %v56
    %106 = vmatprep.subr.mxu0 %v60
    %107 = vmatpush1.msra.mxu0 %v59
    %108 = vmatprep.subr.mxu0 %v95
    %109 = vmatpush1.msra.mxu0 %v92
    %110 = vmatprep.subr.mxu0 0.0
    %111 = vmatpush1.msra.mxu0 0.0
    %112 = vmatprep.subr.mxu0 0.0
    %113 = vmatpush1.msra.mxu0 0.0
    %114 = vmatprep.subr.mxu0 0.0
    %115 = vmatpush1.msra.mxu0 0.0
    %116 = vmatprep.subr.mxu0 0.0
    %117 = vmatpush1.msra.mxu0 0.0
    %118 = vmatprep.subr.mxu0 0.0
    %119 = vmatpush1.msra.mxu0 0.0
    %120 = vmatprep.subr.mxu0 0.0
    %121 = vmatpush1.msra.mxu0 0.0
    %122 = vmatprep.subr.mxu0 0.0
    %123 = vmatpush1.msra.mxu0 0.0
    %124 = vmatprep.subr.mxu0 0.0
    %125 = vmatpush1.msra.mxu0 0.0
    %126 = vmatprep.subr.mxu0 0.0
    %127 = vmatpush1.msra.mxu0 0.0
    %128 = vmatprep.subr.mxu0 0.0
    %129 = vmatpush1.msra.mxu0 0.0
    %130 = vmatprep.subr.mxu0 0.0
    %131 = vmatpush1.msra.mxu0 0.0
    %132 = vmatprep.subr.mxu0 0.0
    %133 = vmatpush1.msra.mxu0 0.0
    %134 = vmatprep.subr.mxu0 0.0
    %135 = vmatpush1.msra.mxu0 0.0
    %136 = vmatprep.subr.mxu0 0.0
    %137 = vmatpush1.msra.mxu0 0.0
    %138 = vmatprep.subr.mxu0 0.0
    %139 = vmatpush1.msra.mxu0 0.0
    %140 = vmatprep.subr.mxu0 0.0
    %141 = vmatpush1.msra.mxu0 0.0
    %142 = vmatprep.subr.mxu0 0.0
    %143 = vmatpush1.msra.mxu0 0.0
    %144 = vmatprep.subr.mxu0 0.0
    %145 = vmatpush1.msra.mxu0 0.0
    %146 = vmatprep.subr.mxu0 0.0
    %147 = vmatpush1.msra.mxu0 0.0
    %148 = vmatprep.subr.mxu0 0.0
    %149 = vmatpush1.msra.mxu0 0.0
    %150 = vmatprep.subr.mxu0 0.0
    %151 = vmatpush1.msra.mxu0 0.0
    %152 = vmatprep.subr.mxu0 0.0
    %153 = vmatpush1.msra.mxu0 0.0
    %154 = vmatprep.subr.mxu0 0.0
    %155 = vmatpush1.msra.mxu0 0.0
    %156 = vmatprep.subr.mxu0 0.0
    %157 = vmatpush1.msra.mxu0 0.0
    %158 = vmatprep.subr.mxu0 0.0
    %159 = vmatpush1.msra.mxu0 0.0
    %160 = vmatprep.subr.mxu0 0.0
    %161 = vmatpush1.msra.mxu0 0.0
    %162 = vmatprep.subr.mxu0 0.0
    %163 = vmatpush1.msra.mxu0 0.0
    %164 = vmatprep.mubr.f32.mxu0 0.0
    %165 = vmatmul.mubr.f32.gmra.mrb[0].mxu0 %v67
    %v166 = vpop.f32.mrb[0].mxu0
    %v167 = vadd.f32 0.0, %v166
    %v168 = vpop.f32.mrb[0].mxu0
    %v169 = vadd.f32 0.0, %v168
    %170 = vmatprep.mubr.f32.mxu0 0.0
    %171 = vmatmul.mubr.f32.gmra.mrb[0].mxu0 %v70
    %v172 = vpop.f32.mrb[0].mxu0
    %v173 = vadd.f32 0.0, %v172
    %v174 = vpop.f32.mrb[0].mxu0
    %v175 = vadd.f32 0.0, %v174
    %176 = vmatprep.mubr.f32.mxu0 0.0
    %177 = vmatmul.mubr.f32.gmra.mrb[0].mxu0 %v73
    %v178 = vpop.f32.mrb[0].mxu0
    %v179 = vadd.f32 0.0, %v178
    %v180 = vpop.f32.mrb[0].mxu0
    %v181 = vadd.f32 0.0, %v180
    %182 = vmatprep.mubr.f32.mxu0 0.0
    %183 = vmatmul.mubr.f32.gmra.mrb[0].mxu0 %v76
    %v184 = vpop.f32.mrb[0].mxu0
    %v185 = vadd.f32 0.0, %v184
    %v186 = vpop.f32.mrb[0].mxu0
    %v187 = vadd.f32 0.0, %v186
    %188 = vmatprep.mubr.f32.mxu0 0.0
    %189 = vmatmul.mubr.f32.gmra.mrb[0].mxu0 %v79
    %v190 = vpop.f32.mrb[0].mxu0
    %v191 = vadd.f32 0.0, %v190
    %v192 = vpop.f32.mrb[0].mxu0
    %v193 = vadd.f32 0.0, %v192
    %194 = vmatprep.mubr.f32.mxu0 0.0
    %195 = vmatmul.mubr.f32.gmra.mrb[0].mxu0 %v82
    %v196 = vpop.f32.mrb[0].mxu0
    %v197 = vadd.f32 0.0, %v196
    %v198 = vpop.f32.mrb[0].mxu0
    %v199 = vadd.f32 0.0, %v198
    %200 = vmatprep.mubr.f32.mxu0 0.0
    %201 = vmatmul.mubr.f32.gmra.mrb[0].mxu0 %v85
    %v202 = vpop.f32.mrb[0].mxu0
    %v203 = vadd.f32 0.0, %v202
    %v204 = vpop.f32.mrb[0].mxu0
    %v205 = vadd.f32 0.0, %v204
    %206 = vmatprep.mubr.f32.mxu0 0.0
    %207 = vmatmul.mubr.f32.gmra.mrb[0].mxu0 %v88
    %v208 = vpop.f32.mrb[0].mxu0
    %v209 = vadd.f32 0.0, %v208
    %v210 = vpop.f32.mrb[0].mxu0
    %v211 = vadd.f32 0.0, %v210
    %212 = vdwg.mxu0
    %213 = vmatprep.subr.mxu0 0.0
    %214 = vmatpush1.msra.mxu0 %v52
    %215 = vmatprep.subr.mxu0 0.0
    %216 = vmatpush1.msra.mxu0 %v55
    %217 = vmatprep.subr.mxu0 0.0
    %218 = vmatpush1.msra.mxu0 %v58
    %219 = vmatprep.subr.mxu0 0.0
    %220 = vmatpush1.msra.mxu0 %v61
    %221 = vmatprep.subr.mxu0 0.0
    %222 = vmatpush1.msra.mxu0 %v98
    %223 = vmatprep.subr.mxu0 0.0
    %224 = vmatpush1.msra.mxu0 0.0
    %225 = vmatprep.subr.mxu0 0.0
    %226 = vmatpush1.msra.mxu0 0.0
    %227 = vmatprep.subr.mxu0 0.0
    %228 = vmatpush1.msra.mxu0 0.0
    %229 = vmatprep.subr.mxu0 0.0
    %230 = vmatpush1.msra.mxu0 0.0
    %231 = vmatprep.subr.mxu0 0.0
    %232 = vmatpush1.msra.mxu0 0.0
    %233 = vmatprep.subr.mxu0 0.0
    %234 = vmatpush1.msra.mxu0 0.0
    %235 = vmatprep.subr.mxu0 0.0
    %236 = vmatpush1.msra.mxu0 0.0
    %237 = vmatprep.subr.mxu0 0.0
    %238 = vmatpush1.msra.mxu0 0.0
    %239 = vmatprep.subr.mxu0 0.0
    %240 = vmatpush1.msra.mxu0 0.0
    %241 = vmatprep.subr.mxu0 0.0
    %242 = vmatpush1.msra.mxu0 0.0
    %243 = vmatprep.subr.mxu0 0.0
    %244 = vmatpush1.msra.mxu0 0.0
    %245 = vmatprep.subr.mxu0 0.0
    %246 = vmatpush1.msra.mxu0 0.0
    %247 = vmatprep.subr.mxu0 0.0
    %248 = vmatpush1.msra.mxu0 0.0
    %249 = vmatprep.subr.mxu0 0.0
    %250 = vmatpush1.msra.mxu0 0.0
    %251 = vmatprep.subr.mxu0 0.0
    %252 = vmatpush1.msra.mxu0 0.0
    %253 = vmatprep.subr.mxu0 0.0
    %254 = vmatpush1.msra.mxu0 0.0
    %255 = vmatprep.subr.mxu0 0.0
    %256 = vmatpush1.msra.mxu0 0.0
    %257 = vmatprep.subr.mxu0 0.0
    %258 = vmatpush1.msra.mxu0 0.0
    %259 = vmatprep.subr.mxu0 0.0
    %260 = vmatpush1.msra.mxu0 0.0
    %261 = vmatprep.subr.mxu0 0.0
    %262 = vmatpush1.msra.mxu0 0.0
    %263 = vmatprep.subr.mxu0 0.0
    %264 = vmatpush1.msra.mxu0 0.0
    %265 = vmatprep.subr.mxu0 0.0
    %266 = vmatpush1.msra.mxu0 0.0
    %267 = vmatprep.subr.mxu0 0.0
    %268 = vmatpush1.msra.mxu0 0.0
    %269 = vmatprep.subr.mxu0 0.0
    %270 = vmatpush1.msra.mxu0 0.0
    %271 = vmatprep.subr.mxu0 0.0
    %272 = vmatpush1.msra.mxu0 0.0
    %273 = vmatprep.subr.mxu0 0.0
    %274 = vmatpush1.msra.mxu0 0.0
    %275 = vmatprep.subr.mxu0 0.0
    %276 = vmatpush1.msra.mxu0 0.0
    %277 = vmatprep.mubr.f32.mxu0 0.0
    %278 = vmatmul.mubr.f32.gmra.mrb[0].mxu0 %v67
    %v279 = vpop.f32.mrb[0].mxu0
    %v280 = vadd.f32 0.0, %v279
    %v281 = vpop.f32.mrb[0].mxu0
    %282 = vmatprep.mubr.f32.mxu0 0.0
    %283 = vmatmul.mubr.f32.gmra.mrb[0].mxu0 %v70
    %v284 = vpop.f32.mrb[0].mxu0
    %v285 = vadd.f32 0.0, %v284
    %v286 = vpop.f32.mrb[0].mxu0
    %287 = vmatprep.mubr.f32.mxu0 0.0
    %288 = vmatmul.mubr.f32.gmra.mrb[0].mxu0 %v73
    %v289 = vpop.f32.mrb[0].mxu0
    %v290 = vadd.f32 0.0, %v289
    %v291 = vpop.f32.mrb[0].mxu0
    %292 = vmatprep.mubr.f32.mxu0 0.0
    %293 = vmatmul.mubr.f32.gmra.mrb[0].mxu0 %v76
    %v294 = vpop.f32.mrb[0].mxu0
    %v295 = vadd.f32 0.0, %v294
    %v296 = vpop.f32.mrb[0].mxu0
    %297 = vmatprep.mubr.f32.mxu0 0.0
    %298 = vmatmul.mubr.f32.gmra.mrb[0].mxu0 %v79
    %v299 = vpop.f32.mrb[0].mxu0
    %v300 = vadd.f32 0.0, %v299
    %v301 = vpop.f32.mrb[0].mxu0
    %302 = vmatprep.mubr.f32.mxu0 0.0
    %303 = vmatmul.mubr.f32.gmra.mrb[0].mxu0 %v82
    %v304 = vpop.f32.mrb[0].mxu0
    %v305 = vadd.f32 0.0, %v304
    %v306 = vpop.f32.mrb[0].mxu0
    %307 = vmatprep.mubr.f32.mxu0 0.0
    %308 = vmatmul.mubr.f32.gmra.mrb[0].mxu0 %v85
    %v309 = vpop.f32.mrb[0].mxu0
    %v310 = vadd.f32 0.0, %v309
    %v311 = vpop.f32.mrb[0].mxu0
    %312 = vmatprep.mubr.f32.mxu0 0.0
    %313 = vmatmul.mubr.f32.gmra.mrb[0].mxu0 %v88
    %v314 = vpop.f32.mrb[0].mxu0
    %v315 = vadd.f32 0.0, %v314
    %v316 = vpop.f32.mrb[0].mxu0
    %317 = vdwg.mxu0
    %318 = vst [vmem:[#allocation2] sm:$0xff] %v167
    %319 = vst [vmem:[#allocation2 + $0x8] sm:$0xff] %v169
    %320 = vst [vmem:[#allocation2 + $0x10] sm:$0xff] %v280
    %321 = vst [vmem:[#allocation2 + $0x18] sm:$0xff] %v173
    %322 = vst [vmem:[#allocation2 + $0x20] sm:$0xff] %v175
    %323 = vst [vmem:[#allocation2 + $0x28] sm:$0xff] %v285
    %324 = vst [vmem:[#allocation2 + $0x30] sm:$0xff] %v179
    %325 = vst [vmem:[#allocation2 + $0x38] sm:$0xff] %v181
    %326 = vst [vmem:[#allocation2 + $0x40] sm:$0xff] %v290
    %327 = vst [vmem:[#allocation2 + $0x48] sm:$0xff] %v185
    %328 = vst [vmem:[#allocation2 + $0x50] sm:$0xff] %v187
    %329 = vst [vmem:[#allocation2 + $0x58] sm:$0xff] %v295
    %330 = vst [vmem:[#allocation2 + $0x60] sm:$0xff] %v191
    %331 = vst [vmem:[#allocation2 + $0x68] sm:$0xff] %v193
    %332 = vst [vmem:[#allocation2 + $0x70] sm:$0xff] %v300
    %333 = vst [vmem:[#allocation2 + $0x78] sm:$0xff] %v197
    %334 = vst [vmem:[#allocation2 + $0x80] sm:$0xff] %v199
    %335 = vst [vmem:[#allocation2 + $0x88] sm:$0xff] %v305
    %336 = vst [vmem:[#allocation2 + $0x90] sm:$0xff] %v203
    %337 = vst [vmem:[#allocation2 + $0x98] sm:$0xff] %v205
    %338 = vst [vmem:[#allocation2 + $0xa0] sm:$0xff] %v310
    %339 = vst [vmem:[#allocation2 + $0xa8] sm:$0xff] %v209
    %340 = vst [vmem:[#allocation2 + $0xb0] sm:$0xff] %v211
    %341 = vst [vmem:[#allocation2 + $0xb8] sm:$0xff] %v315
    %v342 = vld [vmem:[#allocation4] sm:$0xff]
    %v343 = vld [vmem:[#allocation4 + $0x8] sm:$0xff]
    %v344 = vld [vmem:[#allocation4 + $0x10] sm:$0xff]
    %v345 = vld [vmem:[#allocation4 + $0x18] sm:$0xff]
    %v346 = vld [vmem:[#allocation4 + $0x20] sm:$0xff]
    %v347 = vld [vmem:[#allocation4 + $0x28] sm:$0xff]
    %v348 = vld [vmem:[#allocation4 + $0x30] sm:$0xff]
    %v349 = vld [vmem:[#allocation4 + $0x38] sm:$0xff]
    %v350 = vld [vmem:[#allocation4 + $0x40] sm:$0xff]
    %v351 = vld [vmem:[#allocation4 + $0x48] sm:$0xff]
    %v352 = vld [vmem:[#allocation4 + $0x50] sm:$0xff]
    %v353 = vld [vmem:[#allocation4 + $0x58] sm:$0xff]
    %v354 = vld [vmem:[#allocation4 + $0x60] sm:$0xff]
    %v355 = vld [vmem:[#allocation4 + $0x68] sm:$0xff]
    %v356 = vld [vmem:[#allocation4 + $0x70] sm:$0xff]
    %v357 = vld [vmem:[#allocation4 + $0x78] sm:$0xff]
    %v358 = vld [vmem:[#allocation4 + $0x80] sm:$0xff]
    %v359 = vld [vmem:[#allocation4 + $0x88] sm:$0xff]
    %v360 = vld [vmem:[#allocation4 + $0x90] sm:$0xff]
    %v361 = vld [vmem:[#allocation4 + $0x98] sm:$0xff]
    %v362 = vld [vmem:[#allocation4 + $0xa0] sm:$0xff]
    %v363 = vld [vmem:[#allocation4 + $0xa8] sm:$0xff]
    %v364 = vld [vmem:[#allocation4 + $0xb0] sm:$0xff]
    %v365 = vld [vmem:[#allocation4 + $0xb8] sm:$0xff]
    %v366 = vld [vmem:[#allocation4 + $0xc0] sm:$0xff]
    %v367 = vld [vmem:[#allocation4 + $0xc8] sm:$0xff]
    %v368 = vld [vmem:[#allocation4 + $0xd0] sm:$0xff]
    %v369 = vld [vmem:[#allocation4 + $0xd8] sm:$0xff]
    %v370 = vld [vmem:[#allocation4 + $0xe0] sm:$0xff]
    %v371 = vld [vmem:[#allocation4 + $0xe8] sm:$0xff]
    %v372 = vld [vmem:[#allocation4 + $0xf0] sm:$0xff]
    %v373 = vld [vmem:[#allocation4 + $0xf8] sm:$0xff]
    %v374 = vld [vmem:[#allocation4 + $0x100] sm:$0xff]
    %v375 = vld [vmem:[#allocation4 + $0x108] sm:$0xff]
    %v376 = vld [vmem:[#allocation4 + $0x110] sm:$0xff]
    %v377 = vld [vmem:[#allocation4 + $0x118] sm:$0xff]
    %v378 = vld [vmem:[#allocation4 + $0x120] sm:$0xff]
    %v379 = vld [vmem:[#allocation4 + $0x128] sm:$0xff]
    %v380 = vld [vmem:[#allocation4 + $0x130] sm:$0xff]
    %v381 = vld [vmem:[#allocation4 + $0x138] sm:$0xff]
    %v382 = vld [vmem:[#allocation4 + $0x140] sm:$0xff]
    %v383 = vld [vmem:[#allocation4 + $0x148] sm:$0xff]
    %v384 = vld [vmem:[#allocation4 + $0x150] sm:$0xff]
    %v385 = vld [vmem:[#allocation4 + $0x158] sm:$0xff]
    %v386 = vld [vmem:[#allocation4 + $0x160] sm:$0xff]
    %v387 = vld [vmem:[#allocation4 + $0x168] sm:$0xff]
    %v388 = vld [vmem:[#allocation4 + $0x170] sm:$0xff]
    %v389 = vld [vmem:[#allocation4 + $0x178] sm:$0xff]
    %v390 = vld [vmem:[%s3] sm:$0x1]
    %v392 = vlaneseq
    %v393 = vshrl.u32 %v392, 7
    %v394 = vsub.s32 0, %v393
    %v395 = vrot.slane %v390, %v394
    %v397 = vld [vmem:[#allocation2] sm:$0xff]
    %v398 = vld [vmem:[#allocation2 + $0x8] sm:$0xff]
    %v399 = vld [vmem:[#allocation2 + $0x10] sm:$0xff]
    %400 = vmatprep.subr.mxu0 %v343
    %401 = vmatpush1.msra.mxu0 %v342
    %402 = vmatprep.subr.mxu0 %v346
    %403 = vmatpush1.msra.mxu0 %v345
    %404 = vmatprep.subr.mxu0 %v349
    %405 = vmatpush1.msra.mxu0 %v348
    %406 = vmatprep.subr.mxu0 %v352
    %407 = vmatpush1.msra.mxu0 %v351
    %408 = vmatprep.subr.mxu0 %v355
    %409 = vmatpush1.msra.mxu0 %v354
    %410 = vmatprep.subr.mxu0 %v358
    %411 = vmatpush1.msra.mxu0 %v357
    %412 = vmatprep.subr.mxu0 %v361
    %413 = vmatpush1.msra.mxu0 %v360
    %414 = vmatprep.subr.mxu0 %v364
    %415 = vmatpush1.msra.mxu0 %v363
    %416 = vmatprep.subr.mxu0 %v367
    %417 = vmatpush1.msra.mxu0 %v366
    %418 = vmatprep.subr.mxu0 %v370
    %419 = vmatpush1.msra.mxu0 %v369
    %420 = vmatprep.subr.mxu0 %v373
    %421 = vmatpush1.msra.mxu0 %v372
    %422 = vmatprep.subr.mxu0 %v376
    %423 = vmatpush1.msra.mxu0 %v375
    %424 = vmatprep.subr.mxu0 %v379
    %425 = vmatpush1.msra.mxu0 %v378
    %426 = vmatprep.subr.mxu0 %v382
    %427 = vmatpush1.msra.mxu0 %v381
    %428 = vmatprep.subr.mxu0 %v385
    %429 = vmatpush1.msra.mxu0 %v384
    %430 = vmatprep.subr.mxu0 %v388
    %431 = vmatpush1.msra.mxu0 %v387
    %432 = vmatprep.subr.mxu0 0.0
    %433 = vmatpush1.msra.mxu0 0.0
    %434 = vmatprep.subr.mxu0 0.0
    %435 = vmatpush1.msra.mxu0 0.0
    %436 = vmatprep.subr.mxu0 0.0
    %437 = vmatpush1.msra.mxu0 0.0
    %438 = vmatprep.subr.mxu0 0.0
    %439 = vmatpush1.msra.mxu0 0.0
    %440 = vmatprep.subr.mxu0 0.0
    %441 = vmatpush1.msra.mxu0 0.0
    %442 = vmatprep.subr.mxu0 0.0
    %443 = vmatpush1.msra.mxu0 0.0
    %444 = vmatprep.subr.mxu0 0.0
    %445 = vmatpush1.msra.mxu0 0.0
    %446 = vmatprep.subr.mxu0 0.0
    %447 = vmatpush1.msra.mxu0 0.0
    %448 = vmatprep.subr.mxu0 0.0
    %449 = vmatpush1.msra.mxu0 0.0
    %450 = vmatprep.subr.mxu0 0.0
    %451 = vmatpush1.msra.mxu0 0.0
    %452 = vmatprep.subr.mxu0 0.0
    %453 = vmatpush1.msra.mxu0 0.0
    %454 = vmatprep.subr.mxu0 0.0
    %455 = vmatpush1.msra.mxu0 0.0
    %456 = vmatprep.subr.mxu0 0.0
    %457 = vmatpush1.msra.mxu0 0.0
    %458 = vmatprep.subr.mxu0 0.0
    %459 = vmatpush1.msra.mxu0 0.0
    %460 = vmatprep.subr.mxu0 0.0
    %461 = vmatpush1.msra.mxu0 0.0
    %462 = vmatprep.subr.mxu0 0.0
    %463 = vmatpush1.msra.mxu0 0.0
    %464 = vmatprep.mubr.f32.mxu0 0.0
    %465 = vmatmul.mubr.f32.gmra.mrb[0].mxu0 0.0
    %v466 = vpop.f32.mrb[0].mxu0
    %v467 = vadd.f32 0.0, %v466
    %v468 = vpop.f32.mrb[0].mxu0
    %v469 = vadd.f32 0.0, %v468
    %470 = vdwg.mxu0
    %471 = vmatprep.subr.mxu0 0.0
    %472 = vmatpush1.msra.mxu0 %v344
    %473 = vmatprep.subr.mxu0 0.0
    %474 = vmatpush1.msra.mxu0 %v347
    %475 = vmatprep.subr.mxu0 0.0
    %476 = vmatpush1.msra.mxu0 %v350
    %477 = vmatprep.subr.mxu0 0.0
    %478 = vmatpush1.msra.mxu0 %v353
    %479 = vmatprep.subr.mxu0 0.0
    %480 = vmatpush1.msra.mxu0 %v356
    %481 = vmatprep.subr.mxu0 0.0
    %482 = vmatpush1.msra.mxu0 %v359
    %483 = vmatprep.subr.mxu0 0.0
    %484 = vmatpush1.msra.mxu0 %v362
    %485 = vmatprep.subr.mxu0 0.0
    %486 = vmatpush1.msra.mxu0 %v365
    %487 = vmatprep.subr.mxu0 0.0
    %488 = vmatpush1.msra.mxu0 %v368
    %489 = vmatprep.subr.mxu0 0.0
    %490 = vmatpush1.msra.mxu0 %v371
    %491 = vmatprep.subr.mxu0 0.0
    %492 = vmatpush1.msra.mxu0 %v374
    %493 = vmatprep.subr.mxu0 0.0
    %494 = vmatpush1.msra.mxu0 %v377
    %495 = vmatprep.subr.mxu0 0.0
    %496 = vmatpush1.msra.mxu0 %v380
    %497 = vmatprep.subr.mxu0 0.0
    %498 = vmatpush1.msra.mxu0 %v383
    %499 = vmatprep.subr.mxu0 0.0
    %500 = vmatpush1.msra.mxu0 %v386
    %501 = vmatprep.subr.mxu0 0.0
    %502 = vmatpush1.msra.mxu0 %v389
    %503 = vmatprep.subr.mxu0 0.0
    %504 = vmatpush1.msra.mxu0 0.0
    %505 = vmatprep.subr.mxu0 0.0
    %506 = vmatpush1.msra.mxu0 0.0
    %507 = vmatprep.subr.mxu0 0.0
    %508 = vmatpush1.msra.mxu0 0.0
    %509 = vmatprep.subr.mxu0 0.0
    %510 = vmatpush1.msra.mxu0 0.0
    %511 = vmatprep.subr.mxu0 0.0
    %512 = vmatpush1.msra.mxu0 0.0
    %513 = vmatprep.subr.mxu0 0.0
    %514 = vmatpush1.msra.mxu0 0.0
    %515 = vmatprep.subr.mxu0 0.0
    %516 = vmatpush1.msra.mxu0 0.0
    %517 = vmatprep.subr.mxu0 0.0
    %518 = vmatpush1.msra.mxu0 0.0
    %519 = vmatprep.subr.mxu0 0.0
    %520 = vmatpush1.msra.mxu0 0.0
    %521 = vmatprep.subr.mxu0 0.0
    %522 = vmatpush1.msra.mxu0 0.0
    %523 = vmatprep.subr.mxu0 0.0
    %524 = vmatpush1.msra.mxu0 0.0
    %525 = vmatprep.subr.mxu0 0.0
    %526 = vmatpush1.msra.mxu0 0.0
    %527 = vmatprep.subr.mxu0 0.0
    %528 = vmatpush1.msra.mxu0 0.0
    %529 = vmatprep.subr.mxu0 0.0
    %530 = vmatpush1.msra.mxu0 0.0
    %531 = vmatprep.subr.mxu0 0.0
    %532 = vmatpush1.msra.mxu0 0.0
    %533 = vmatprep.subr.mxu0 0.0
    %534 = vmatpush1.msra.mxu0 0.0
    %535 = vmatprep.mubr.f32.mxu0 0.0
    %536 = vmatmul.mubr.f32.gmra.mrb[0].mxu0 0.0
    %v537 = vpop.f32.mrb[0].mxu0
    %v538 = vadd.f32 0.0, %v537
    %v539 = vpop.f32.mrb[0].mxu0
    %540 = vdwg.mxu0
    %v541 = vadd.f32 %v397, %v467
    %v542 = vadd.f32 %v398, %v469
    %v543 = vxor.u32 %v541, 2147483648
    %v544 = vxor.u32 %v542, 2147483648
    %v545 = vmul.f32 %v543, 1.442695
    %v546 = vpow.pop %v545
    %v547 = vmul.f32 %v544, 1.442695
    %v548 = vpow.pop %v547
    %v549 = vadd.f32 %v546, 1.0
    %v550 = vadd.f32 %v548, 1.0
    %v551 = vrcp.pop %v549
    %v552 = vmul.f32 1.0, %v551
    %v553 = vrcp.pop %v550
    %v554 = vmul.f32 1.0, %v553
    %v555 = vadd.f32 %v538, %v395
    %v556 = vmul.f32 %v552, %v555
    %v557 = vadd.f32 %v399, %v556
    %v558 = vtanh.pop %v557
    %v559 = vsub.f32 1.0, %v554
    %v560 = vmul.f32 %v559, %v558
    %v561 = vmul.f32 %v554, 0.0
    %v562 = vadd.f32 %v560, %v561
    %563 = vst [vmem:[#allocation7] sm:$0xff] %v562
    %v564 = vld [vmem:[#allocation2 + $0x18] sm:$0xff]
    %v565 = vld [vmem:[#allocation2 + $0x20] sm:$0xff]
    %v566 = vld [vmem:[#allocation2 + $0x28] sm:$0xff]
    %567 = vmatprep.subr.mxu0 %v343
    %568 = vmatpush1.msra.mxu0 %v342
    %569 = vmatprep.subr.mxu0 %v346
    %570 = vmatpush1.msra.mxu0 %v345
    %571 = vmatprep.subr.mxu0 %v349
    %572 = vmatpush1.msra.mxu0 %v348
    %573 = vmatprep.subr.mxu0 %v352
    %574 = vmatpush1.msra.mxu0 %v351
    %575 = vmatprep.subr.mxu0 %v355
    %576 = vmatpush1.msra.mxu0 %v354
    %577 = vmatprep.subr.mxu0 %v358
    %578 = vmatpush1.msra.mxu0 %v357
    %579 = vmatprep.subr.mxu0 %v361
    %580 = vmatpush1.msra.mxu0 %v360
    %581 = vmatprep.subr.mxu0 %v364
    %582 = vmatpush1.msra.mxu0 %v363
    %583 = vmatprep.subr.mxu0 %v367
    %584 = vmatpush1.msra.mxu0 %v366
    %585 = vmatprep.subr.mxu0 %v370
    %586 = vmatpush1.msra.mxu0 %v369
    %587 = vmatprep.subr.mxu0 %v373
    %588 = vmatpush1.msra.mxu0 %v372
    %589 = vmatprep.subr.mxu0 %v376
    %590 = vmatpush1.msra.mxu0 %v375
    %591 = vmatprep.subr.mxu0 %v379
    %592 = vmatpush1.msra.mxu0 %v378
    %593 = vmatprep.subr.mxu0 %v382
    %594 = vmatpush1.msra.mxu0 %v381
    %595 = vmatprep.subr.mxu0 %v385
    %596 = vmatpush1.msra.mxu0 %v384
    %597 = vmatprep.subr.mxu0 %v388
    %598 = vmatpush1.msra.mxu0 %v387
    %599 = vmatprep.subr.mxu0 0.0
    %600 = vmatpush1.msra.mxu0 0.0
    %601 = vmatprep.subr.mxu0 0.0
    %602 = vmatpush1.msra.mxu0 0.0
    %603 = vmatprep.subr.mxu0 0.0
    %604 = vmatpush1.msra.mxu0 0.0
    %605 = vmatprep.subr.mxu0 0.0
    %606 = vmatpush1.msra.mxu0 0.0
    %607 = vmatprep.subr.mxu0 0.0
    %608 = vmatpush1.msra.mxu0 0.0
    %609 = vmatprep.subr.mxu0 0.0
    %610 = vmatpush1.msra.mxu0 0.0
    %611 = vmatprep.subr.mxu0 0.0
    %612 = vmatpush1.msra.mxu0 0.0
    %613 = vmatprep.subr.mxu0 0.0
    %614 = vmatpush1.msra.mxu0 0.0
    %615 = vmatprep.subr.mxu0 0.0
    %616 = vmatpush1.msra.mxu0 0.0
    %617 = vmatprep.subr.mxu0 0.0
    %618 = vmatpush1.msra.mxu0 0.0
    %619 = vmatprep.subr.mxu0 0.0
    %620 = vmatpush1.msra.mxu0 0.0
    %621 = vmatprep.subr.mxu0 0.0
    %622 = vmatpush1.msra.mxu0 0.0
    %623 = vmatprep.subr.mxu0 0.0
    %624 = vmatpush1.msra.mxu0 0.0
    %625 = vmatprep.subr.mxu0 0.0
    %626 = vmatpush1.msra.mxu0 0.0
    %627 = vmatprep.subr.mxu0 0.0
    %628 = vmatpush1.msra.mxu0 0.0
    %629 = vmatprep.subr.mxu0 0.0
    %630 = vmatpush1.msra.mxu0 0.0
    %631 = vmatprep.mubr.f32.mxu0 0.0
    %632 = vmatmul.mubr.f32.gmra.mrb[0].mxu0 %v562
    %v633 = vpop.f32.mrb[0].mxu0
    %v634 = vadd.f32 0.0, %v633
    %v635 = vpop.f32.mrb[0].mxu0
    %v636 = vadd.f32 0.0, %v635
    %637 = vdwg.mxu0
    %638 = vmatprep.subr.mxu0 0.0
    %639 = vmatpush1.msra.mxu0 %v344
    %640 = vmatprep.subr.mxu0 0.0
    %641 = vmatpush1.msra.mxu0 %v347
    %642 = vmatprep.subr.mxu0 0.0
    %643 = vmatpush1.msra.mxu0 %v350
    %644 = vmatprep.subr.mxu0 0.0
    %645 = vmatpush1.msra.mxu0 %v353
    %646 = vmatprep.subr.mxu0 0.0
    %647 = vmatpush1.msra.mxu0 %v356
    %648 = vmatprep.subr.mxu0 0.0
    %649 = vmatpush1.msra.mxu0 %v359
    %650 = vmatprep.subr.mxu0 0.0
    %651 = vmatpush1.msra.mxu0 %v362
    %652 = vmatprep.subr.mxu0 0.0
    %653 = vmatpush1.msra.mxu0 %v365
    %654 = vmatprep.subr.mxu0 0.0
    %655 = vmatpush1.msra.mxu0 %v368
    %656 = vmatprep.subr.mxu0 0.0
    %657 = vmatpush1.msra.mxu0 %v371
    %658 = vmatprep.subr.mxu0 0.0
    %659 = vmatpush1.msra.mxu0 %v374
    %660 = vmatprep.subr.mxu0 0.0
    %661 = vmatpush1.msra.mxu0 %v377
    %662 = vmatprep.subr.mxu0 0.0
    %663 = vmatpush1.msra.mxu0 %v380
    %664 = vmatprep.subr.mxu0 0.0
    %665 = vmatpush1.msra.mxu0 %v383
    %666 = vmatprep.subr.mxu0 0.0
    %667 = vmatpush1.msra.mxu0 %v386
    %668 = vmatprep.subr.mxu0 0.0
    %669 = vmatpush1.msra.mxu0 %v389
    %670 = vmatprep.subr.mxu0 0.0
    %671 = vmatpush1.msra.mxu0 0.0
    %672 = vmatprep.subr.mxu0 0.0
    %673 = vmatpush1.msra.mxu0 0.0
    %674 = vmatprep.subr.mxu0 0.0
    %675 = vmatpush1.msra.mxu0 0.0
    %676 = vmatprep.subr.mxu0 0.0
    %677 = vmatpush1.msra.mxu0 0.0
    %678 = vmatprep.subr.mxu0 0.0
    %679 = vmatpush1.msra.mxu0 0.0
    %680 = vmatprep.subr.mxu0 0.0
    %681 = vmatpush1.msra.mxu0 0.0
    %682 = vmatprep.subr.mxu0 0.0
    %683 = vmatpush1.msra.mxu0 0.0
    %684 = vmatprep.subr.mxu0 0.0
    %685 = vmatpush1.msra.mxu0 0.0
    %686 = vmatprep.subr.mxu0 0.0
    %687 = vmatpush1.msra.mxu0 0.0
    %688 = vmatprep.subr.mxu0 0.0
    %689 = vmatpush1.msra.mxu0 0.0
    %690 = vmatprep.subr.mxu0 0.0
    %691 = vmatpush1.msra.mxu0 0.0
    %692 = vmatprep.subr.mxu0 0.0
    %693 = vmatpush1.msra.mxu0 0.0
    %694 = vmatprep.subr.mxu0 0.0
    %695 = vmatpush1.msra.mxu0 0.0
    %696 = vmatprep.subr.mxu0 0.0
    %697 = vmatpush1.msra.mxu0 0.0
    %698 = vmatprep.subr.mxu0 0.0
    %699 = vmatpush1.msra.mxu0 0.0
    %700 = vmatprep.subr.mxu0 0.0
    %701 = vmatpush1.msra.mxu0 0.0
    %702 = vmatprep.mubr.f32.mxu0 0.0
    %703 = vmatmul.mubr.f32.gmra.mrb[0].mxu0 %v562
    %v704 = vpop.f32.mrb[0].mxu0
    %v705 = vadd.f32 0.0, %v704
    %v706 = vpop.f32.mrb[0].mxu0
    %707 = vdwg.mxu0
    %v708 = vadd.f32 %v564, %v634
    %v709 = vadd.f32 %v565, %v636
    %v710 = vxor.u32 %v708, 2147483648
    %v711 = vxor.u32 %v709, 2147483648
    %v712 = vmul.f32 %v710, 1.442695
    %v713 = vpow.pop %v712
    %v714 = vmul.f32 %v711, 1.442695
    %v715 = vpow.pop %v714
    %v716 = vadd.f32 %v713, 1.0
    %v717 = vadd.f32 %v715, 1.0
    %v718 = vrcp.pop %v716
    %v719 = vmul.f32 1.0, %v718
    %v720 = vrcp.pop %v717
    %v721 = vmul.f32 1.0, %v720
    %v722 = vadd.f32 %v705, %v395
    %v723 = vmul.f32 %v719, %v722
    %v724 = vadd.f32 %v566, %v723
    %v725 = vtanh.pop %v724
    %v726 = vsub.f32 1.0, %v721
    %v727 = vmul.f32 %v726, %v725
    %v728 = vmul.f32 %v721, %v562
    %v729 = vadd.f32 %v727, %v728
    %730 = vst [vmem:[#allocation7 + $0x8] sm:$0xff] %v729
    %v731 = vld [vmem:[#allocation2 + $0x30] sm:$0xff]
    %v732 = vld [vmem:[#allocation2 + $0x38] sm:$0xff]
    %v733 = vld [vmem:[#allocation2 + $0x40] sm:$0xff]
    %734 = vmatprep.subr.mxu0 %v343
    %735 = vmatpush1.msra.mxu0 %v342
    %736 = vmatprep.subr.mxu0 %v346
    %737 = vmatpush1.msra.mxu0 %v345
    %738 = vmatprep.subr.mxu0 %v349
    %739 = vmatpush1.msra.mxu0 %v348
    %740 = vmatprep.subr.mxu0 %v352
    %741 = vmatpush1.msra.mxu0 %v351
    %742 = vmatprep.subr.mxu0 %v355
    %743 = vmatpush1.msra.mxu0 %v354
    %744 = vmatprep.subr.mxu0 %v358
    %745 = vmatpush1.msra.mxu0 %v357
    %746 = vmatprep.subr.mxu0 %v361
    %747 = vmatpush1.msra.mxu0 %v360
    %748 = vmatprep.subr.mxu0 %v364
    %749 = vmatpush1.msra.mxu0 %v363
    %750 = vmatprep.subr.mxu0 %v367
    %751 = vmatpush1.msra.mxu0 %v366
    %752 = vmatprep.subr.mxu0 %v370
    %753 = vmatpush1.msra.mxu0 %v369
    %754 = vmatprep.subr.mxu0 %v373
    %755 = vmatpush1.msra.mxu0 %v372
    %756 = vmatprep.subr.mxu0 %v376
    %757 = vmatpush1.msra.mxu0 %v375
    %758 = vmatprep.subr.mxu0 %v379
    %759 = vmatpush1.msra.mxu0 %v378
    %760 = vmatprep.subr.mxu0 %v382
    %761 = vmatpush1.msra.mxu0 %v381
    %762 = vmatprep.subr.mxu0 %v385
    %763 = vmatpush1.msra.mxu0 %v384
    %764 = vmatprep.subr.mxu0 %v388
    %765 = vmatpush1.msra.mxu0 %v387
    %766 = vmatprep.subr.mxu0 0.0
    %767 = vmatpush1.msra.mxu0 0.0
    %768 = vmatprep.subr.mxu0 0.0
    %769 = vmatpush1.msra.mxu0 0.0
    %770 = vmatprep.subr.mxu0 0.0
    %771 = vmatpush1.msra.mxu0 0.0
    %772 = vmatprep.subr.mxu0 0.0
    %773 = vmatpush1.msra.mxu0 0.0
    %774 = vmatprep.subr.mxu0 0.0
    %775 = vmatpush1.msra.mxu0 0.0
    %776 = vmatprep.subr.mxu0 0.0
    %777 = vmatpush1.msra.mxu0 0.0
    %778 = vmatprep.subr.mxu0 0.0
    %779 = vmatpush1.msra.mxu0 0.0
    %780 = vmatprep.subr.mxu0 0.0
    %781 = vmatpush1.msra.mxu0 0.0
    %782 = vmatprep.subr.mxu0 0.0
    %783 = vmatpush1.msra.mxu0 0.0
    %784 = vmatprep.subr.mxu0 0.0
    %785 = vmatpush1.msra.mxu0 0.0
    %786 = vmatprep.subr.mxu0 0.0
    %787 = vmatpush1.msra.mxu0 0.0
    %788 = vmatprep.subr.mxu0 0.0
    %789 = vmatpush1.msra.mxu0 0.0
    %790 = vmatprep.subr.mxu0 0.0
    %791 = vmatpush1.msra.mxu0 0.0
    %792 = vmatprep.subr.mxu0 0.0
    %793 = vmatpush1.msra.mxu0 0.0
    %794 = vmatprep.subr.mxu0 0.0
    %795 = vmatpush1.msra.mxu0 0.0
    %796 = vmatprep.subr.mxu0 0.0
    %797 = vmatpush1.msra.mxu0 0.0
    %798 = vmatprep.mubr.f32.mxu0 0.0
    %799 = vmatmul.mubr.f32.gmra.mrb[0].mxu0 %v729
    %v800 = vpop.f32.mrb[0].mxu0
    %v801 = vadd.f32 0.0, %v800
    %v802 = vpop.f32.mrb[0].mxu0
    %v803 = vadd.f32 0.0, %v802
    %804 = vdwg.mxu0
    %805 = vmatprep.subr.mxu0 0.0
    %806 = vmatpush1.msra.mxu0 %v344
    %807 = vmatprep.subr.mxu0 0.0
    %808 = vmatpush1.msra.mxu0 %v347
    %809 = vmatprep.subr.mxu0 0.0
    %810 = vmatpush1.msra.mxu0 %v350
    %811 = vmatprep.subr.mxu0 0.0
    %812 = vmatpush1.msra.mxu0 %v353
    %813 = vmatprep.subr.mxu0 0.0
    %814 = vmatpush1.msra.mxu0 %v356
    %815 = vmatprep.subr.mxu0 0.0
    %816 = vmatpush1.msra.mxu0 %v359
    %817 = vmatprep.subr.mxu0 0.0
    %818 = vmatpush1.msra.mxu0 %v362
    %819 = vmatprep.subr.mxu0 0.0
    %820 = vmatpush1.msra.mxu0 %v365
    %821 = vmatprep.subr.mxu0 0.0
    %822 = vmatpush1.msra.mxu0 %v368
    %823 = vmatprep.subr.mxu0 0.0
    %824 = vmatpush1.msra.mxu0 %v371
    %825 = vmatprep.subr.mxu0 0.0
    %826 = vmatpush1.msra.mxu0 %v374
    %827 = vmatprep.subr.mxu0 0.0
    %828 = vmatpush1.msra.mxu0 %v377
    %829 = vmatprep.subr.mxu0 0.0
    %830 = vmatpush1.msra.mxu0 %v380
    %831 = vmatprep.subr.mxu0 0.0
    %832 = vmatpush1.msra.mxu0 %v383
    %833 = vmatprep.subr.mxu0 0.0
    %834 = vmatpush1.msra.mxu0 %v386
    %835 = vmatprep.subr.mxu0 0.0
    %836 = vmatpush1.msra.mxu0 %v389
    %837 = vmatprep.subr.mxu0 0.0
    %838 = vmatpush1.msra.mxu0 0.0
    %839 = vmatprep.subr.mxu0 0.0
    %840 = vmatpush1.msra.mxu0 0.0
    %841 = vmatprep.subr.mxu0 0.0
    %842 = vmatpush1.msra.mxu0 0.0
    %843 = vmatprep.subr.mxu0 0.0
    %844 = vmatpush1.msra.mxu0 0.0
    %845 = vmatprep.subr.mxu0 0.0
    %846 = vmatpush1.msra.mxu0 0.0
    %847 = vmatprep.subr.mxu0 0.0
    %848 = vmatpush1.msra.mxu0 0.0
    %849 = vmatprep.subr.mxu0 0.0
    %850 = vmatpush1.msra.mxu0 0.0
    %851 = vmatprep.subr.mxu0 0.0
    %852 = vmatpush1.msra.mxu0 0.0
    %853 = vmatprep.subr.mxu0 0.0
    %854 = vmatpush1.msra.mxu0 0.0
    %855 = vmatprep.subr.mxu0 0.0
    %856 = vmatpush1.msra.mxu0 0.0
    %857 = vmatprep.subr.mxu0 0.0
    %858 = vmatpush1.msra.mxu0 0.0
    %859 = vmatprep.subr.mxu0 0.0
    %860 = vmatpush1.msra.mxu0 0.0
    %861 = vmatprep.subr.mxu0 0.0
    %862 = vmatpush1.msra.mxu0 0.0
    %863 = vmatprep.subr.mxu0 0.0
    %864 = vmatpush1.msra.mxu0 0.0
    %865 = vmatprep.subr.mxu0 0.0
    %866 = vmatpush1.msra.mxu0 0.0
    %867 = vmatprep.subr.mxu0 0.0
    %868 = vmatpush1.msra.mxu0 0.0
    %869 = vmatprep.mubr.f32.mxu0 0.0
    %870 = vmatmul.mubr.f32.gmra.mrb[0].mxu0 %v729
    %v871 = vpop.f32.mrb[0].mxu0
    %v872 = vadd.f32 0.0, %v871
    %v873 = vpop.f32.mrb[0].mxu0
    %874 = vdwg.mxu0
    %v875 = vadd.f32 %v731, %v801
    %v876 = vadd.f32 %v732, %v803
    %v877 = vxor.u32 %v875, 2147483648
    %v878 = vxor.u32 %v876, 2147483648
    %v879 = vmul.f32 %v877, 1.442695
    %v880 = vpow.pop %v879
    %v881 = vmul.f32 %v878, 1.442695
    %v882 = vpow.pop %v881
    %v883 = vadd.f32 %v880, 1.0
    %v884 = vadd.f32 %v882, 1.0
    %v885 = vrcp.pop %v883
    %v886 = vmul.f32 1.0, %v885
    %v887 = vrcp.pop %v884
    %v888 = vmul.f32 1.0, %v887
    %v889 = vadd.f32 %v872, %v395
    %v890 = vmul.f32 %v886, %v889
    %v891 = vadd.f32 %v733, %v890
    %v892 = vtanh.pop %v891
    %v893 = vsub.f32 1.0, %v888
    %v894 = vmul.f32 %v893, %v892
    %v895 = vmul.f32 %v888, %v729
    %v896 = vadd.f32 %v894, %v895
    %897 = vst [vmem:[#allocation7 + $0x10] sm:$0xff] %v896
    %v898 = vld [vmem:[#allocation2 + $0x48] sm:$0xff]
    %v899 = vld [vmem:[#allocation2 + $0x50] sm:$0xff]
    %v900 = vld [vmem:[#allocation2 + $0x58] sm:$0xff]
    %901 = vmatprep.subr.mxu0 %v343
    %902 = vmatpush1.msra.mxu0 %v342
    %903 = vmatprep.subr.mxu0 %v346
    %904 = vmatpush1.msra.mxu0 %v345
    %905 = vmatprep.subr.mxu0 %v349
    %906 = vmatpush1.msra.mxu0 %v348
    %907 = vmatprep.subr.mxu0 %v352
    %908 = vmatpush1.msra.mxu0 %v351
    %909 = vmatprep.subr.mxu0 %v355
    %910 = vmatpush1.msra.mxu0 %v354
    %911 = vmatprep.subr.mxu0 %v358
    %912 = vmatpush1.msra.mxu0 %v357
    %913 = vmatprep.subr.mxu0 %v361
    %914 = vmatpush1.msra.mxu0 %v360
    %915 = vmatprep.subr.mxu0 %v364
    %916 = vmatpush1.msra.mxu0 %v363
    %917 = vmatprep.subr.mxu0 %v367
    %918 = vmatpush1.msra.mxu0 %v366
    %919 = vmatprep.subr.mxu0 %v370
    %920 = vmatpush1.msra.mxu0 %v369
    %921 = vmatprep.subr.mxu0 %v373
    %922 = vmatpush1.msra.mxu0 %v372
    %923 = vmatprep.subr.mxu0 %v376
    %924 = vmatpush1.msra.mxu0 %v375
    %925 = vmatprep.subr.mxu0 %v379
    %926 = vmatpush1.msra.mxu0 %v378
    %927 = vmatprep.subr.mxu0 %v382
    %928 = vmatpush1.msra.mxu0 %v381
    %929 = vmatprep.subr.mxu0 %v385
    %930 = vmatpush1.msra.mxu0 %v384
    %931 = vmatprep.subr.mxu0 %v388
    %932 = vmatpush1.msra.mxu0 %v387
    %933 = vmatprep.subr.mxu0 0.0
    %934 = vmatpush1.msra.mxu0 0.0
    %935 = vmatprep.subr.mxu0 0.0
    %936 = vmatpush1.msra.mxu0 0.0
    %937 = vmatprep.subr.mxu0 0.0
    %938 = vmatpush1.msra.mxu0 0.0
    %939 = vmatprep.subr.mxu0 0.0
    %940 = vmatpush1.msra.mxu0 0.0
    %941 = vmatprep.subr.mxu0 0.0
    %942 = vmatpush1.msra.mxu0 0.0
    %943 = vmatprep.subr.mxu0 0.0
    %944 = vmatpush1.msra.mxu0 0.0
    %945 = vmatprep.subr.mxu0 0.0
    %946 = vmatpush1.msra.mxu0 0.0
    %947 = vmatprep.subr.mxu0 0.0
    %948 = vmatpush1.msra.mxu0 0.0
    %949 = vmatprep.subr.mxu0 0.0
    %950 = vmatpush1.msra.mxu0 0.0
    %951 = vmatprep.subr.mxu0 0.0
    %952 = vmatpush1.msra.mxu0 0.0
    %953 = vmatprep.subr.mxu0 0.0
    %954 = vmatpush1.msra.mxu0 0.0
    %955 = vmatprep.subr.mxu0 0.0
    %956 = vmatpush1.msra.mxu0 0.0
    %957 = vmatprep.subr.mxu0 0.0
    %958 = vmatpush1.msra.mxu0 0.0
    %959 = vmatprep.subr.mxu0 0.0
    %960 = vmatpush1.msra.mxu0 0.0
    %961 = vmatprep.subr.mxu0 0.0
    %962 = vmatpush1.msra.mxu0 0.0
    %963 = vmatprep.subr.mxu0 0.0
    %964 = vmatpush1.msra.mxu0 0.0
    %965 = vmatprep.mubr.f32.mxu0 0.0
    %966 = vmatmul.mubr.f32.gmra.mrb[0].mxu0 %v896
    %v967 = vpop.f32.mrb[0].mxu0
    %v968 = vadd.f32 0.0, %v967
    %v969 = vpop.f32.mrb[0].mxu0
    %v970 = vadd.f32 0.0, %v969
    %971 = vdwg.mxu0
    %972 = vmatprep.subr.mxu0 0.0
    %973 = vmatpush1.msra.mxu0 %v344
    %974 = vmatprep.subr.mxu0 0.0
    %975 = vmatpush1.msra.mxu0 %v347
    %976 = vmatprep.subr.mxu0 0.0
    %977 = vmatpush1.msra.mxu0 %v350
    %978 = vmatprep.subr.mxu0 0.0
    %979 = vmatpush1.msra.mxu0 %v353
    %980 = vmatprep.subr.mxu0 0.0
    %981 = vmatpush1.msra.mxu0 %v356
    %982 = vmatprep.subr.mxu0 0.0
    %983 = vmatpush1.msra.mxu0 %v359
    %984 = vmatprep.subr.mxu0 0.0
    %985 = vmatpush1.msra.mxu0 %v362
    %986 = vmatprep.subr.mxu0 0.0
    %987 = vmatpush1.msra.mxu0 %v365
    %988 = vmatprep.subr.mxu0 0.0
    %989 = vmatpush1.msra.mxu0 %v368
    %990 = vmatprep.subr.mxu0 0.0
    %991 = vmatpush1.msra.mxu0 %v371
    %992 = vmatprep.subr.mxu0 0.0
    %993 = vmatpush1.msra.mxu0 %v374
    %994 = vmatprep.subr.mxu0 0.0
    %995 = vmatpush1.msra.mxu0 %v377
    %996 = vmatprep.subr.mxu0 0.0
    %997 = vmatpush1.msra.mxu0 %v380
    %998 = vmatprep.subr.mxu0 0.0
    %999 = vmatpush1.msra.mxu0 %v383
    %1000 = vmatprep.subr.mxu0 0.0
    %1001 = vmatpush1.msra.mxu0 %v386
    %1002 = vmatprep.subr.mxu0 0.0
    %1003 = vmatpush1.msra.mxu0 %v389
    %1004 = vmatprep.subr.mxu0 0.0
    %1005 = vmatpush1.msra.mxu0 0.0
    %1006 = vmatprep.subr.mxu0 0.0
    %1007 = vmatpush1.msra.mxu0 0.0
    %1008 = vmatprep.subr.mxu0 0.0
    %1009 = vmatpush1.msra.mxu0 0.0
    %1010 = vmatprep.subr.mxu0 0.0
    %1011 = vmatpush1.msra.mxu0 0.0
    %1012 = vmatprep.subr.mxu0 0.0
    %1013 = vmatpush1.msra.mxu0 0.0
    %1014 = vmatprep.subr.mxu0 0.0
    %1015 = vmatpush1.msra.mxu0 0.0
    %1016 = vmatprep.subr.mxu0 0.0
    %1017 = vmatpush1.msra.mxu0 0.0
    %1018 = vmatprep.subr.mxu0 0.0
    %1019 = vmatpush1.msra.mxu0 0.0
    %1020 = vmatprep.subr.mxu0 0.0
    %1021 = vmatpush1.msra.mxu0 0.0
    %1022 = vmatprep.subr.mxu0 0.0
    %1023 = vmatpush1.msra.mxu0 0.0
    %1024 = vmatprep.subr.mxu0 0.0
    %1025 = vmatpush1.msra.mxu0 0.0
    %1026 = vmatprep.subr.mxu0 0.0
    %1027 = vmatpush1.msra.mxu0 0.0
    %1028 = vmatprep.subr.mxu0 0.0
    %1029 = vmatpush1.msra.mxu0 0.0
    %1030 = vmatprep.subr.mxu0 0.0
    %1031 = vmatpush1.msra.mxu0 0.0
    %1032 = vmatprep.subr.mxu0 0.0
    %1033 = vmatpush1.msra.mxu0 0.0
    %1034 = vmatprep.subr.mxu0 0.0
    %1035 = vmatpush1.msra.mxu0 0.0
    %1036 = vmatprep.mubr.f32.mxu0 0.0
    %1037 = vmatmul.mubr.f32.gmra.mrb[0].mxu0 %v896
    %v1038 = vpop.f32.mrb[0].mxu0
    %v1039 = vadd.f32 0.0, %v1038
    %v1040 = vpop.f32.mrb[0].mxu0
    %1041 = vdwg.mxu0
    %v1042 = vadd.f32 %v898, %v968
    %v1043 = vadd.f32 %v899, %v970
    %v1044 = vxor.u32 %v1042, 2147483648
    %v1045 = vxor.u32 %v1043, 2147483648
    %v1046 = vmul.f32 %v1044, 1.442695
    %v1047 = vpow.pop %v1046
    %v1048 = vmul.f32 %v1045, 1.442695
    %v1049 = vpow.pop %v1048
    %v1050 = vadd.f32 %v1047, 1.0
    %v1051 = vadd.f32 %v1049, 1.0
    %v1052 = vrcp.pop %v1050
    %v1053 = vmul.f32 1.0, %v1052
    %v1054 = vrcp.pop %v1051
    %v1055 = vmul.f32 1.0, %v1054
    %v1056 = vadd.f32 %v1039, %v395
    %v1057 = vmul.f32 %v1053, %v1056
    %v1058 = vadd.f32 %v900, %v1057
    %v1059 = vtanh.pop %v1058
    %v1060 = vsub.f32 1.0, %v1055
    %v1061 = vmul.f32 %v1060, %v1059
    %v1062 = vmul.f32 %v1055, %v896
    %v1063 = vadd.f32 %v1061, %v1062
    %1064 = vst [vmem:[#allocation7 + $0x18] sm:$0xff] %v1063
    %v1065 = vld [vmem:[#allocation2 + $0x60] sm:$0xff]
    %v1066 = vld [vmem:[#allocation2 + $0x68] sm:$0xff]
    %v1067 = vld [vmem:[#allocation2 + $0x70] sm:$0xff]
    %1068 = vmatprep.subr.mxu0 %v343
    %1069 = vmatpush1.msra.mxu0 %v342
    %1070 = vmatprep.subr.mxu0 %v346
    %1071 = vmatpush1.msra.mxu0 %v345
    %1072 = vmatprep.subr.mxu0 %v349
    %1073 = vmatpush1.msra.mxu0 %v348
    %1074 = vmatprep.subr.mxu0 %v352
    %1075 = vmatpush1.msra.mxu0 %v351
    %1076 = vmatprep.subr.mxu0 %v355
    %1077 = vmatpush1.msra.mxu0 %v354
    %1078 = vmatprep.subr.mxu0 %v358
    %1079 = vmatpush1.msra.mxu0 %v357
    %1080 = vmatprep.subr.mxu0 %v361
    %1081 = vmatpush1.msra.mxu0 %v360
    %1082 = vmatprep.subr.mxu0 %v364
    %1083 = vmatpush1.msra.mxu0 %v363
    %1084 = vmatprep.subr.mxu0 %v367
    %1085 = vmatpush1.msra.mxu0 %v366
    %1086 = vmatprep.subr.mxu0 %v370
    %1087 = vmatpush1.msra.mxu0 %v369
    %1088 = vmatprep.subr.mxu0 %v373
    %1089 = vmatpush1.msra.mxu0 %v372
    %1090 = vmatprep.subr.mxu0 %v376
    %1091 = vmatpush1.msra.mxu0 %v375
    %1092 = vmatprep.subr.mxu0 %v379
    %1093 = vmatpush1.msra.mxu0 %v378
    %1094 = vmatprep.subr.mxu0 %v382
    %1095 = vmatpush1.msra.mxu0 %v381
    %1096 = vmatprep.subr.mxu0 %v385
    %1097 = vmatpush1.msra.mxu0 %v384
    %1098 = vmatprep.subr.mxu0 %v388
    %1099 = vmatpush1.msra.mxu0 %v387
    %1100 = vmatprep.subr.mxu0 0.0
    %1101 = vmatpush1.msra.mxu0 0.0
    %1102 = vmatprep.subr.mxu0 0.0
    %1103 = vmatpush1.msra.mxu0 0.0
    %1104 = vmatprep.subr.mxu0 0.0
    %1105 = vmatpush1.msra.mxu0 0.0
    %1106 = vmatprep.subr.mxu0 0.0
    %1107 = vmatpush1.msra.mxu0 0.0
    %1108 = vmatprep.subr.mxu0 0.0
    %1109 = vmatpush1.msra.mxu0 0.0
    %1110 = vmatprep.subr.mxu0 0.0
    %1111 = vmatpush1.msra.mxu0 0.0
    %1112 = vmatprep.subr.mxu0 0.0
    %1113 = vmatpush1.msra.mxu0 0.0
    %1114 = vmatprep.subr.mxu0 0.0
    %1115 = vmatpush1.msra.mxu0 0.0
    %1116 = vmatprep.subr.mxu0 0.0
    %1117 = vmatpush1.msra.mxu0 0.0
    %1118 = vmatprep.subr.mxu0 0.0
    %1119 = vmatpush1.msra.mxu0 0.0
    %1120 = vmatprep.subr.mxu0 0.0
    %1121 = vmatpush1.msra.mxu0 0.0
    %1122 = vmatprep.subr.mxu0 0.0
    %1123 = vmatpush1.msra.mxu0 0.0
    %1124 = vmatprep.subr.mxu0 0.0
    %1125 = vmatpush1.msra.mxu0 0.0
    %1126 = vmatprep.subr.mxu0 0.0
    %1127 = vmatpush1.msra.mxu0 0.0
    %1128 = vmatprep.subr.mxu0 0.0
    %1129 = vmatpush1.msra.mxu0 0.0
    %1130 = vmatprep.subr.mxu0 0.0
    %1131 = vmatpush1.msra.mxu0 0.0
    %1132 = vmatprep.mubr.f32.mxu0 0.0
    %1133 = vmatmul.mubr.f32.gmra.mrb[0].mxu0 %v1063
    %v1134 = vpop.f32.mrb[0].mxu0
    %v1135 = vadd.f32 0.0, %v1134
    %v1136 = vpop.f32.mrb[0].mxu0
    %v1137 = vadd.f32 0.0, %v1136
    %1138 = vdwg.mxu0
    %1139 = vmatprep.subr.mxu0 0.0
    %1140 = vmatpush1.msra.mxu0 %v344
    %1141 = vmatprep.subr.mxu0 0.0
    %1142 = vmatpush1.msra.mxu0 %v347
    %1143 = vmatprep.subr.mxu0 0.0
    %1144 = vmatpush1.msra.mxu0 %v350
    %1145 = vmatprep.subr.mxu0 0.0
    %1146 = vmatpush1.msra.mxu0 %v353
    %1147 = vmatprep.subr.mxu0 0.0
    %1148 = vmatpush1.msra.mxu0 %v356
    %1149 = vmatprep.subr.mxu0 0.0
    %1150 = vmatpush1.msra.mxu0 %v359
    %1151 = vmatprep.subr.mxu0 0.0
    %1152 = vmatpush1.msra.mxu0 %v362
    %1153 = vmatprep.subr.mxu0 0.0
    %1154 = vmatpush1.msra.mxu0 %v365
    %1155 = vmatprep.subr.mxu0 0.0
    %1156 = vmatpush1.msra.mxu0 %v368
    %1157 = vmatprep.subr.mxu0 0.0
    %1158 = vmatpush1.msra.mxu0 %v371
    %1159 = vmatprep.subr.mxu0 0.0
    %1160 = vmatpush1.msra.mxu0 %v374
    %1161 = vmatprep.subr.mxu0 0.0
    %1162 = vmatpush1.msra.mxu0 %v377
    %1163 = vmatprep.subr.mxu0 0.0
    %1164 = vmatpush1.msra.mxu0 %v380
    %1165 = vmatprep.subr.mxu0 0.0
    %1166 = vmatpush1.msra.mxu0 %v383
    %1167 = vmatprep.subr.mxu0 0.0
    %1168 = vmatpush1.msra.mxu0 %v386
    %1169 = vmatprep.subr.mxu0 0.0
    %1170 = vmatpush1.msra.mxu0 %v389
    %1171 = vmatprep.subr.mxu0 0.0
    %1172 = vmatpush1.msra.mxu0 0.0
    %1173 = vmatprep.subr.mxu0 0.0
    %1174 = vmatpush1.msra.mxu0 0.0
    %1175 = vmatprep.subr.mxu0 0.0
    %1176 = vmatpush1.msra.mxu0 0.0
    %1177 = vmatprep.subr.mxu0 0.0
    %1178 = vmatpush1.msra.mxu0 0.0
    %1179 = vmatprep.subr.mxu0 0.0
    %1180 = vmatpush1.msra.mxu0 0.0
    %1181 = vmatprep.subr.mxu0 0.0
    %1182 = vmatpush1.msra.mxu0 0.0
    %1183 = vmatprep.subr.mxu0 0.0
    %1184 = vmatpush1.msra.mxu0 0.0
    %1185 = vmatprep.subr.mxu0 0.0
    %1186 = vmatpush1.msra.mxu0 0.0
    %1187 = vmatprep.subr.mxu0 0.0
    %1188 = vmatpush1.msra.mxu0 0.0
    %1189 = vmatprep.subr.mxu0 0.0
    %1190 = vmatpush1.msra.mxu0 0.0
    %1191 = vmatprep.subr.mxu0 0.0
    %1192 = vmatpush1.msra.mxu0 0.0
    %1193 = vmatprep.subr.mxu0 0.0
    %1194 = vmatpush1.msra.mxu0 0.0
    %1195 = vmatprep.subr.mxu0 0.0
    %1196 = vmatpush1.msra.mxu0 0.0
    %1197 = vmatprep.subr.mxu0 0.0
    %1198 = vmatpush1.msra.mxu0 0.0
    %1199 = vmatprep.subr.mxu0 0.0
    %1200 = vmatpush1.msra.mxu0 0.0
    %1201 = vmatprep.subr.mxu0 0.0
    %1202 = vmatpush1.msra.mxu0 0.0
    %1203 = vmatprep.mubr.f32.mxu0 0.0
    %1204 = vmatmul.mubr.f32.gmra.mrb[0].mxu0 %v1063
    %v1205 = vpop.f32.mrb[0].mxu0
    %v1206 = vadd.f32 0.0, %v1205
    %v1207 = vpop.f32.mrb[0].mxu0
    %1208 = vdwg.mxu0
    %v1209 = vadd.f32 %v1065, %v1135
    %v1210 = vadd.f32 %v1066, %v1137
    %v1211 = vxor.u32 %v1209, 2147483648
    %v1212 = vxor.u32 %v1210, 2147483648
    %v1213 = vmul.f32 %v1211, 1.442695
    %v1214 = vpow.pop %v1213
    %v1215 = vmul.f32 %v1212, 1.442695
    %v1216 = vpow.pop %v1215
    %v1217 = vadd.f32 %v1214, 1.0
    %v1218 = vadd.f32 %v1216, 1.0
    %v1219 = vrcp.pop %v1217
    %v1220 = vmul.f32 1.0, %v1219
    %v1221 = vrcp.pop %v1218
    %v1222 = vmul.f32 1.0, %v1221
    %v1223 = vadd.f32 %v1206, %v395
    %v1224 = vmul.f32 %v1220, %v1223
    %v1225 = vadd.f32 %v1067, %v1224
    %v1226 = vtanh.pop %v1225
    %v1227 = vsub.f32 1.0, %v1222
    %v1228 = vmul.f32 %v1227, %v1226
    %v1229 = vmul.f32 %v1222, %v1063
    %v1230 = vadd.f32 %v1228, %v1229
    %1231 = vst [vmem:[#allocation7 + $0x20] sm:$0xff] %v1230
    %v1232 = vld [vmem:[#allocation2 + $0x78] sm:$0xff]
    %v1233 = vld [vmem:[#allocation2 + $0x80] sm:$0xff]
    %v1234 = vld [vmem:[#allocation2 + $0x88] sm:$0xff]
    %1235 = vmatprep.subr.mxu0 %v343
    %1236 = vmatpush1.msra.mxu0 %v342
    %1237 = vmatprep.subr.mxu0 %v346
    %1238 = vmatpush1.msra.mxu0 %v345
    %1239 = vmatprep.subr.mxu0 %v349
    %1240 = vmatpush1.msra.mxu0 %v348
    %1241 = vmatprep.subr.mxu0 %v352
    %1242 = vmatpush1.msra.mxu0 %v351
    %1243 = vmatprep.subr.mxu0 %v355
    %1244 = vmatpush1.msra.mxu0 %v354
    %1245 = vmatprep.subr.mxu0 %v358
    %1246 = vmatpush1.msra.mxu0 %v357
    %1247 = vmatprep.subr.mxu0 %v361
    %1248 = vmatpush1.msra.mxu0 %v360
    %1249 = vmatprep.subr.mxu0 %v364
    %1250 = vmatpush1.msra.mxu0 %v363
    %1251 = vmatprep.subr.mxu0 %v367
    %1252 = vmatpush1.msra.mxu0 %v366
    %1253 = vmatprep.subr.mxu0 %v370
    %1254 = vmatpush1.msra.mxu0 %v369
    %1255 = vmatprep.subr.mxu0 %v373
    %1256 = vmatpush1.msra.mxu0 %v372
    %1257 = vmatprep.subr.mxu0 %v376
    %1258 = vmatpush1.msra.mxu0 %v375
    %1259 = vmatprep.subr.mxu0 %v379
    %1260 = vmatpush1.msra.mxu0 %v378
    %1261 = vmatprep.subr.mxu0 %v382
    %1262 = vmatpush1.msra.mxu0 %v381
    %1263 = vmatprep.subr.mxu0 %v385
    %1264 = vmatpush1.msra.mxu0 %v384
    %1265 = vmatprep.subr.mxu0 %v388
    %1266 = vmatpush1.msra.mxu0 %v387
    %1267 = vmatprep.subr.mxu0 0.0
    %1268 = vmatpush1.msra.mxu0 0.0
    %1269 = vmatprep.subr.mxu0 0.0
    %1270 = vmatpush1.msra.mxu0 0.0
    %1271 = vmatprep.subr.mxu0 0.0
    %1272 = vmatpush1.msra.mxu0 0.0
    %1273 = vmatprep.subr.mxu0 0.0
    %1274 = vmatpush1.msra.mxu0 0.0
    %1275 = vmatprep.subr.mxu0 0.0
    %1276 = vmatpush1.msra.mxu0 0.0
    %1277 = vmatprep.subr.mxu0 0.0
    %1278 = vmatpush1.msra.mxu0 0.0
    %1279 = vmatprep.subr.mxu0 0.0
    %1280 = vmatpush1.msra.mxu0 0.0
    %1281 = vmatprep.subr.mxu0 0.0
    %1282 = vmatpush1.msra.mxu0 0.0
    %1283 = vmatprep.subr.mxu0 0.0
    %1284 = vmatpush1.msra.mxu0 0.0
    %1285 = vmatprep.subr.mxu0 0.0
    %1286 = vmatpush1.msra.mxu0 0.0
    %1287 = vmatprep.subr.mxu0 0.0
    %1288 = vmatpush1.msra.mxu0 0.0
    %1289 = vmatprep.subr.mxu0 0.0
    %1290 = vmatpush1.msra.mxu0 0.0
    %1291 = vmatprep.subr.mxu0 0.0
    %1292 = vmatpush1.msra.mxu0 0.0
    %1293 = vmatprep.subr.mxu0 0.0
    %1294 = vmatpush1.msra.mxu0 0.0
    %1295 = vmatprep.subr.mxu0 0.0
    %1296 = vmatpush1.msra.mxu0 0.0
    %1297 = vmatprep.subr.mxu0 0.0
    %1298 = vmatpush1.msra.mxu0 0.0
    %1299 = vmatprep.mubr.f32.mxu0 0.0
    %1300 = vmatmul.mubr.f32.gmra.mrb[0].mxu0 %v1230
    %v1301 = vpop.f32.mrb[0].mxu0
    %v1302 = vadd.f32 0.0, %v1301
    %v1303 = vpop.f32.mrb[0].mxu0
    %v1304 = vadd.f32 0.0, %v1303
    %1305 = vdwg.mxu0
    %1306 = vmatprep.subr.mxu0 0.0
    %1307 = vmatpush1.msra.mxu0 %v344
    %1308 = vmatprep.subr.mxu0 0.0
    %1309 = vmatpush1.msra.mxu0 %v347
    %1310 = vmatprep.subr.mxu0 0.0
    %1311 = vmatpush1.msra.mxu0 %v350
    %1312 = vmatprep.subr.mxu0 0.0
    %1313 = vmatpush1.msra.mxu0 %v353
    %1314 = vmatprep.subr.mxu0 0.0
    %1315 = vmatpush1.msra.mxu0 %v356
    %1316 = vmatprep.subr.mxu0 0.0
    %1317 = vmatpush1.msra.mxu0 %v359
    %1318 = vmatprep.subr.mxu0 0.0
    %1319 = vmatpush1.msra.mxu0 %v362
    %1320 = vmatprep.subr.mxu0 0.0
    %1321 = vmatpush1.msra.mxu0 %v365
    %1322 = vmatprep.subr.mxu0 0.0
    %1323 = vmatpush1.msra.mxu0 %v368
    %1324 = vmatprep.subr.mxu0 0.0
    %1325 = vmatpush1.msra.mxu0 %v371
    %1326 = vmatprep.subr.mxu0 0.0
    %1327 = vmatpush1.msra.mxu0 %v374
    %1328 = vmatprep.subr.mxu0 0.0
    %1329 = vmatpush1.msra.mxu0 %v377
    %1330 = vmatprep.subr.mxu0 0.0
    %1331 = vmatpush1.msra.mxu0 %v380
    %1332 = vmatprep.subr.mxu0 0.0
    %1333 = vmatpush1.msra.mxu0 %v383
    %1334 = vmatprep.subr.mxu0 0.0
    %1335 = vmatpush1.msra.mxu0 %v386
    %1336 = vmatprep.subr.mxu0 0.0
    %1337 = vmatpush1.msra.mxu0 %v389
    %1338 = vmatprep.subr.mxu0 0.0
    %1339 = vmatpush1.msra.mxu0 0.0
    %1340 = vmatprep.subr.mxu0 0.0
    %1341 = vmatpush1.msra.mxu0 0.0
    %1342 = vmatprep.subr.mxu0 0.0
    %1343 = vmatpush1.msra.mxu0 0.0
    %1344 = vmatprep.subr.mxu0 0.0
    %1345 = vmatpush1.msra.mxu0 0.0
    %1346 = vmatprep.subr.mxu0 0.0
    %1347 = vmatpush1.msra.mxu0 0.0
    %1348 = vmatprep.subr.mxu0 0.0
    %1349 = vmatpush1.msra.mxu0 0.0
    %1350 = vmatprep.subr.mxu0 0.0
    %1351 = vmatpush1.msra.mxu0 0.0
    %1352 = vmatprep.subr.mxu0 0.0
    %1353 = vmatpush1.msra.mxu0 0.0
    %1354 = vmatprep.subr.mxu0 0.0
    %1355 = vmatpush1.msra.mxu0 0.0
    %1356 = vmatprep.subr.mxu0 0.0
    %1357 = vmatpush1.msra.mxu0 0.0
    %1358 = vmatprep.subr.mxu0 0.0
    %1359 = vmatpush1.msra.mxu0 0.0
    %1360 = vmatprep.subr.mxu0 0.0
    %1361 = vmatpush1.msra.mxu0 0.0
    %1362 = vmatprep.subr.mxu0 0.0
    %1363 = vmatpush1.msra.mxu0 0.0
    %1364 = vmatprep.subr.mxu0 0.0
    %1365 = vmatpush1.msra.mxu0 0.0
    %1366 = vmatprep.subr.mxu0 0.0
    %1367 = vmatpush1.msra.mxu0 0.0
    %1368 = vmatprep.subr.mxu0 0.0
    %1369 = vmatpush1.msra.mxu0 0.0
    %1370 = vmatprep.mubr.f32.mxu0 0.0
    %1371 = vmatmul.mubr.f32.gmra.mrb[0].mxu0 %v1230
    %v1372 = vpop.f32.mrb[0].mxu0
    %v1373 = vadd.f32 0.0, %v1372
    %v1374 = vpop.f32.mrb[0].mxu0
    %1375 = vdwg.mxu0
    %v1376 = vadd.f32 %v1232, %v1302
    %v1377 = vadd.f32 %v1233, %v1304
    %v1378 = vxor.u32 %v1376, 2147483648
    %v1379 = vxor.u32 %v1377, 2147483648
    %v1380 = vmul.f32 %v1378, 1.442695
    %v1381 = vpow.pop %v1380
    %v1382 = vmul.f32 %v1379, 1.442695
    %v1383 = vpow.pop %v1382
    %v1384 = vadd.f32 %v1381, 1.0
    %v1385 = vadd.f32 %v1383, 1.0
    %v1386 = vrcp.pop %v1384
    %v1387 = vmul.f32 1.0, %v1386
    %v1388 = vrcp.pop %v1385
    %v1389 = vmul.f32 1.0, %v1388
    %v1390 = vadd.f32 %v1373, %v395
    %v1391 = vmul.f32 %v1387, %v1390
    %v1392 = vadd.f32 %v1234, %v1391
    %v1393 = vtanh.pop %v1392
    %v1394 = vsub.f32 1.0, %v1389
    %v1395 = vmul.f32 %v1394, %v1393
    %v1396 = vmul.f32 %v1389, %v1230
    %v1397 = vadd.f32 %v1395, %v1396
    %1398 = vst [vmem:[#allocation7 + $0x28] sm:$0xff] %v1397
    %v1399 = vld [vmem:[#allocation2 + $0x90] sm:$0xff]
    %v1400 = vld [vmem:[#allocation2 + $0x98] sm:$0xff]
    %v1401 = vld [vmem:[#allocation2 + $0xa0] sm:$0xff]
    %1402 = vmatprep.subr.mxu0 %v343
    %1403 = vmatpush1.msra.mxu0 %v342
    %1404 = vmatprep.subr.mxu0 %v346
    %1405 = vmatpush1.msra.mxu0 %v345
    %1406 = vmatprep.subr.mxu0 %v349
    %1407 = vmatpush1.msra.mxu0 %v348
    %1408 = vmatprep.subr.mxu0 %v352
    %1409 = vmatpush1.msra.mxu0 %v351
    %1410 = vmatprep.subr.mxu0 %v355
    %1411 = vmatpush1.msra.mxu0 %v354
    %1412 = vmatprep.subr.mxu0 %v358
    %1413 = vmatpush1.msra.mxu0 %v357
    %1414 = vmatprep.subr.mxu0 %v361
    %1415 = vmatpush1.msra.mxu0 %v360
    %1416 = vmatprep.subr.mxu0 %v364
    %1417 = vmatpush1.msra.mxu0 %v363
    %1418 = vmatprep.subr.mxu0 %v367
    %1419 = vmatpush1.msra.mxu0 %v366
    %1420 = vmatprep.subr.mxu0 %v370
    %1421 = vmatpush1.msra.mxu0 %v369
    %1422 = vmatprep.subr.mxu0 %v373
    %1423 = vmatpush1.msra.mxu0 %v372
    %1424 = vmatprep.subr.mxu0 %v376
    %1425 = vmatpush1.msra.mxu0 %v375
    %1426 = vmatprep.subr.mxu0 %v379
    %1427 = vmatpush1.msra.mxu0 %v378
    %1428 = vmatprep.subr.mxu0 %v382
    %1429 = vmatpush1.msra.mxu0 %v381
    %1430 = vmatprep.subr.mxu0 %v385
    %1431 = vmatpush1.msra.mxu0 %v384
    %1432 = vmatprep.subr.mxu0 %v388
    %1433 = vmatpush1.msra.mxu0 %v387
    %1434 = vmatprep.subr.mxu0 0.0
    %1435 = vmatpush1.msra.mxu0 0.0
    %1436 = vmatprep.subr.mxu0 0.0
    %1437 = vmatpush1.msra.mxu0 0.0
    %1438 = vmatprep.subr.mxu0 0.0
    %1439 = vmatpush1.msra.mxu0 0.0
    %1440 = vmatprep.subr.mxu0 0.0
    %1441 = vmatpush1.msra.mxu0 0.0
    %1442 = vmatprep.subr.mxu0 0.0
    %1443 = vmatpush1.msra.mxu0 0.0
    %1444 = vmatprep.subr.mxu0 0.0
    %1445 = vmatpush1.msra.mxu0 0.0
    %1446 = vmatprep.subr.mxu0 0.0
    %1447 = vmatpush1.msra.mxu0 0.0
    %1448 = vmatprep.subr.mxu0 0.0
    %1449 = vmatpush1.msra.mxu0 0.0
    %1450 = vmatprep.subr.mxu0 0.0
    %1451 = vmatpush1.msra.mxu0 0.0
    %1452 = vmatprep.subr.mxu0 0.0
    %1453 = vmatpush1.msra.mxu0 0.0
    %1454 = vmatprep.subr.mxu0 0.0
    %1455 = vmatpush1.msra.mxu0 0.0
    %1456 = vmatprep.subr.mxu0 0.0
    %1457 = vmatpush1.msra.mxu0 0.0
    %1458 = vmatprep.subr.mxu0 0.0
    %1459 = vmatpush1.msra.mxu0 0.0
    %1460 = vmatprep.subr.mxu0 0.0
    %1461 = vmatpush1.msra.mxu0 0.0
    %1462 = vmatprep.subr.mxu0 0.0
    %1463 = vmatpush1.msra.mxu0 0.0
    %1464 = vmatprep.subr.mxu0 0.0
    %1465 = vmatpush1.msra.mxu0 0.0
    %1466 = vmatprep.mubr.f32.mxu0 0.0
    %1467 = vmatmul.mubr.f32.gmra.mrb[0].mxu0 %v1397
    %v1468 = vpop.f32.mrb[0].mxu0
    %v1469 = vadd.f32 0.0, %v1468
    %v1470 = vpop.f32.mrb[0].mxu0
    %v1471 = vadd.f32 0.0, %v1470
    %1472 = vdwg.mxu0
    %1473 = vmatprep.subr.mxu0 0.0
    %1474 = vmatpush1.msra.mxu0 %v344
    %1475 = vmatprep.subr.mxu0 0.0
    %1476 = vmatpush1.msra.mxu0 %v347
    %1477 = vmatprep.subr.mxu0 0.0
    %1478 = vmatpush1.msra.mxu0 %v350
    %1479 = vmatprep.subr.mxu0 0.0
    %1480 = vmatpush1.msra.mxu0 %v353
    %1481 = vmatprep.subr.mxu0 0.0
    %1482 = vmatpush1.msra.mxu0 %v356
    %1483 = vmatprep.subr.mxu0 0.0
    %1484 = vmatpush1.msra.mxu0 %v359
    %1485 = vmatprep.subr.mxu0 0.0
    %1486 = vmatpush1.msra.mxu0 %v362
    %1487 = vmatprep.subr.mxu0 0.0
    %1488 = vmatpush1.msra.mxu0 %v365
    %1489 = vmatprep.subr.mxu0 0.0
    %1490 = vmatpush1.msra.mxu0 %v368
    %1491 = vmatprep.subr.mxu0 0.0
    %1492 = vmatpush1.msra.mxu0 %v371
    %1493 = vmatprep.subr.mxu0 0.0
    %1494 = vmatpush1.msra.mxu0 %v374
    %1495 = vmatprep.subr.mxu0 0.0
    %1496 = vmatpush1.msra.mxu0 %v377
    %1497 = vmatprep.subr.mxu0 0.0
    %1498 = vmatpush1.msra.mxu0 %v380
    %1499 = vmatprep.subr.mxu0 0.0
    %1500 = vmatpush1.msra.mxu0 %v383
    %1501 = vmatprep.subr.mxu0 0.0
    %1502 = vmatpush1.msra.mxu0 %v386
    %1503 = vmatprep.subr.mxu0 0.0
    %1504 = vmatpush1.msra.mxu0 %v389
    %1505 = vmatprep.subr.mxu0 0.0
    %1506 = vmatpush1.msra.mxu0 0.0
    %1507 = vmatprep.subr.mxu0 0.0
    %1508 = vmatpush1.msra.mxu0 0.0
    %1509 = vmatprep.subr.mxu0 0.0
    %1510 = vmatpush1.msra.mxu0 0.0
    %1511 = vmatprep.subr.mxu0 0.0
    %1512 = vmatpush1.msra.mxu0 0.0
    %1513 = vmatprep.subr.mxu0 0.0
    %1514 = vmatpush1.msra.mxu0 0.0
    %1515 = vmatprep.subr.mxu0 0.0
    %1516 = vmatpush1.msra.mxu0 0.0
    %1517 = vmatprep.subr.mxu0 0.0
    %1518 = vmatpush1.msra.mxu0 0.0
    %1519 = vmatprep.subr.mxu0 0.0
    %1520 = vmatpush1.msra.mxu0 0.0
    %1521 = vmatprep.subr.mxu0 0.0
    %1522 = vmatpush1.msra.mxu0 0.0
    %1523 = vmatprep.subr.mxu0 0.0
    %1524 = vmatpush1.msra.mxu0 0.0
    %1525 = vmatprep.subr.mxu0 0.0
    %1526 = vmatpush1.msra.mxu0 0.0
    %1527 = vmatprep.subr.mxu0 0.0
    %1528 = vmatpush1.msra.mxu0 0.0
    %1529 = vmatprep.subr.mxu0 0.0
    %1530 = vmatpush1.msra.mxu0 0.0
    %1531 = vmatprep.subr.mxu0 0.0
    %1532 = vmatpush1.msra.mxu0 0.0
    %1533 = vmatprep.subr.mxu0 0.0
    %1534 = vmatpush1.msra.mxu0 0.0
    %1535 = vmatprep.subr.mxu0 0.0
    %1536 = vmatpush1.msra.mxu0 0.0
    %1537 = vmatprep.mubr.f32.mxu0 0.0
    %1538 = vmatmul.mubr.f32.gmra.mrb[0].mxu0 %v1397
    %v1539 = vpop.f32.mrb[0].mxu0
    %v1540 = vadd.f32 0.0, %v1539
    %v1541 = vpop.f32.mrb[0].mxu0
    %1542 = vdwg.mxu0
    %v1543 = vadd.f32 %v1399, %v1469
    %v1544 = vadd.f32 %v1400, %v1471
    %v1545 = vxor.u32 %v1543, 2147483648
    %v1546 = vxor.u32 %v1544, 2147483648
    %v1547 = vmul.f32 %v1545, 1.442695
    %v1548 = vpow.pop %v1547
    %v1549 = vmul.f32 %v1546, 1.442695
    %v1550 = vpow.pop %v1549
    %v1551 = vadd.f32 %v1548, 1.0
    %v1552 = vadd.f32 %v1550, 1.0
    %v1553 = vrcp.pop %v1551
    %v1554 = vmul.f32 1.0, %v1553
    %v1555 = vrcp.pop %v1552
    %v1556 = vmul.f32 1.0, %v1555
    %v1557 = vadd.f32 %v1540, %v395
    %v1558 = vmul.f32 %v1554, %v1557
    %v1559 = vadd.f32 %v1401, %v1558
    %v1560 = vtanh.pop %v1559
    %v1561 = vsub.f32 1.0, %v1556
    %v1562 = vmul.f32 %v1561, %v1560
    %v1563 = vmul.f32 %v1556, %v1397
    %v1564 = vadd.f32 %v1562, %v1563
    %1565 = vst [vmem:[#allocation7 + $0x30] sm:$0xff] %v1564
    %v1566 = vld [vmem:[#allocation2 + $0xa8] sm:$0xff]
    %v1567 = vld [vmem:[#allocation2 + $0xb0] sm:$0xff]
    %v1568 = vld [vmem:[#allocation2 + $0xb8] sm:$0xff]
    %1569 = vmatprep.subr.mxu0 %v343
    %1570 = vmatpush1.msra.mxu0 %v342
    %1571 = vmatprep.subr.mxu0 %v346
    %1572 = vmatpush1.msra.mxu0 %v345
    %1573 = vmatprep.subr.mxu0 %v349
    %1574 = vmatpush1.msra.mxu0 %v348
    %1575 = vmatprep.subr.mxu0 %v352
    %1576 = vmatpush1.msra.mxu0 %v351
    %1577 = vmatprep.subr.mxu0 %v355
    %1578 = vmatpush1.msra.mxu0 %v354
    %1579 = vmatprep.subr.mxu0 %v358
    %1580 = vmatpush1.msra.mxu0 %v357
    %1581 = vmatprep.subr.mxu0 %v361
    %1582 = vmatpush1.msra.mxu0 %v360
    %1583 = vmatprep.subr.mxu0 %v364
    %1584 = vmatpush1.msra.mxu0 %v363
    %1585 = vmatprep.subr.mxu0 %v367
    %1586 = vmatpush1.msra.mxu0 %v366
    %1587 = vmatprep.subr.mxu0 %v370
    %1588 = vmatpush1.msra.mxu0 %v369
    %1589 = vmatprep.subr.mxu0 %v373
    %1590 = vmatpush1.msra.mxu0 %v372
    %1591 = vmatprep.subr.mxu0 %v376
    %1592 = vmatpush1.msra.mxu0 %v375
    %1593 = vmatprep.subr.mxu0 %v379
    %1594 = vmatpush1.msra.mxu0 %v378
    %1595 = vmatprep.subr.mxu0 %v382
    %1596 = vmatpush1.msra.mxu0 %v381
    %1597 = vmatprep.subr.mxu0 %v385
    %1598 = vmatpush1.msra.mxu0 %v384
    %1599 = vmatprep.subr.mxu0 %v388
    %1600 = vmatpush1.msra.mxu0 %v387
    %1601 = vmatprep.subr.mxu0 0.0
    %1602 = vmatpush1.msra.mxu0 0.0
    %1603 = vmatprep.subr.mxu0 0.0
    %1604 = vmatpush1.msra.mxu0 0.0
    %1605 = vmatprep.subr.mxu0 0.0
    %1606 = vmatpush1.msra.mxu0 0.0
    %1607 = vmatprep.subr.mxu0 0.0
    %1608 = vmatpush1.msra.mxu0 0.0
    %1609 = vmatprep.subr.mxu0 0.0
    %1610 = vmatpush1.msra.mxu0 0.0
    %1611 = vmatprep.subr.mxu0 0.0
    %1612 = vmatpush1.msra.mxu0 0.0
    %1613 = vmatprep.subr.mxu0 0.0
    %1614 = vmatpush1.msra.mxu0 0.0
    %1615 = vmatprep.subr.mxu0 0.0
    %1616 = vmatpush1.msra.mxu0 0.0
    %1617 = vmatprep.subr.mxu0 0.0
    %1618 = vmatpush1.msra.mxu0 0.0
    %1619 = vmatprep.subr.mxu0 0.0
    %1620 = vmatpush1.msra.mxu0 0.0
    %1621 = vmatprep.subr.mxu0 0.0
    %1622 = vmatpush1.msra.mxu0 0.0
    %1623 = vmatprep.subr.mxu0 0.0
    %1624 = vmatpush1.msra.mxu0 0.0
    %1625 = vmatprep.subr.mxu0 0.0
    %1626 = vmatpush1.msra.mxu0 0.0
    %1627 = vmatprep.subr.mxu0 0.0
    %1628 = vmatpush1.msra.mxu0 0.0
    %1629 = vmatprep.subr.mxu0 0.0
    %1630 = vmatpush1.msra.mxu0 0.0
    %1631 = vmatprep.subr.mxu0 0.0
    %1632 = vmatpush1.msra.mxu0 0.0
    %1633 = vmatprep.mubr.f32.mxu0 0.0
    %1634 = vmatmul.mubr.f32.gmra.mrb[0].mxu0 %v1564
    %v1635 = vpop.f32.mrb[0].mxu0
    %v1636 = vadd.f32 0.0, %v1635
    %v1637 = vpop.f32.mrb[0].mxu0
    %v1638 = vadd.f32 0.0, %v1637
    %1639 = vdwg.mxu0
    %1640 = vmatprep.subr.mxu0 0.0
    %1641 = vmatpush1.msra.mxu0 %v344
    %1642 = vmatprep.subr.mxu0 0.0
    %1643 = vmatpush1.msra.mxu0 %v347
    %1644 = vmatprep.subr.mxu0 0.0
    %1645 = vmatpush1.msra.mxu0 %v350
    %1646 = vmatprep.subr.mxu0 0.0
    %1647 = vmatpush1.msra.mxu0 %v353
    %1648 = vmatprep.subr.mxu0 0.0
    %1649 = vmatpush1.msra.mxu0 %v356
    %1650 = vmatprep.subr.mxu0 0.0
    %1651 = vmatpush1.msra.mxu0 %v359
    %1652 = vmatprep.subr.mxu0 0.0
    %1653 = vmatpush1.msra.mxu0 %v362
    %1654 = vmatprep.subr.mxu0 0.0
    %1655 = vmatpush1.msra.mxu0 %v365
    %1656 = vmatprep.subr.mxu0 0.0
    %1657 = vmatpush1.msra.mxu0 %v368
    %1658 = vmatprep.subr.mxu0 0.0
    %1659 = vmatpush1.msra.mxu0 %v371
    %1660 = vmatprep.subr.mxu0 0.0
    %1661 = vmatpush1.msra.mxu0 %v374
    %1662 = vmatprep.subr.mxu0 0.0
    %1663 = vmatpush1.msra.mxu0 %v377
    %1664 = vmatprep.subr.mxu0 0.0
    %1665 = vmatpush1.msra.mxu0 %v380
    %1666 = vmatprep.subr.mxu0 0.0
    %1667 = vmatpush1.msra.mxu0 %v383
    %1668 = vmatprep.subr.mxu0 0.0
    %1669 = vmatpush1.msra.mxu0 %v386
    %1670 = vmatprep.subr.mxu0 0.0
    %1671 = vmatpush1.msra.mxu0 %v389
    %1672 = vmatprep.subr.mxu0 0.0
    %1673 = vmatpush1.msra.mxu0 0.0
    %1674 = vmatprep.subr.mxu0 0.0
    %1675 = vmatpush1.msra.mxu0 0.0
    %1676 = vmatprep.subr.mxu0 0.0
    %1677 = vmatpush1.msra.mxu0 0.0
    %1678 = vmatprep.subr.mxu0 0.0
    %1679 = vmatpush1.msra.mxu0 0.0
    %1680 = vmatprep.subr.mxu0 0.0
    %1681 = vmatpush1.msra.mxu0 0.0
    %1682 = vmatprep.subr.mxu0 0.0
    %1683 = vmatpush1.msra.mxu0 0.0
    %1684 = vmatprep.subr.mxu0 0.0
    %1685 = vmatpush1.msra.mxu0 0.0
    %1686 = vmatprep.subr.mxu0 0.0
    %1687 = vmatpush1.msra.mxu0 0.0
    %1688 = vmatprep.subr.mxu0 0.0
    %1689 = vmatpush1.msra.mxu0 0.0
    %1690 = vmatprep.subr.mxu0 0.0
    %1691 = vmatpush1.msra.mxu0 0.0
    %1692 = vmatprep.subr.mxu0 0.0
    %1693 = vmatpush1.msra.mxu0 0.0
    %1694 = vmatprep.subr.mxu0 0.0
    %1695 = vmatpush1.msra.mxu0 0.0
    %1696 = vmatprep.subr.mxu0 0.0
    %1697 = vmatpush1.msra.mxu0 0.0
    %1698 = vmatprep.subr.mxu0 0.0
    %1699 = vmatpush1.msra.mxu0 0.0
    %1700 = vmatprep.subr.mxu0 0.0
    %1701 = vmatpush1.msra.mxu0 0.0
    %1702 = vmatprep.subr.mxu0 0.0
    %1703 = vmatpush1.msra.mxu0 0.0
    %1704 = vmatprep.mubr.f32.mxu0 0.0
    %1705 = vmatmul.mubr.f32.gmra.mrb[0].mxu0 %v1564
    %v1706 = vpop.f32.mrb[0].mxu0
    %v1707 = vadd.f32 0.0, %v1706
    %v1708 = vpop.f32.mrb[0].mxu0
    %1709 = vdwg.mxu0
    %v1710 = vadd.f32 %v1566, %v1636
    %v1711 = vadd.f32 %v1567, %v1638
    %v1712 = vxor.u32 %v1710, 2147483648
    %v1713 = vxor.u32 %v1711, 2147483648
    %v1714 = vmul.f32 %v1712, 1.442695
    %v1715 = vpow.pop %v1714
    %v1716 = vmul.f32 %v1713, 1.442695
    %v1717 = vpow.pop %v1716
    %v1718 = vadd.f32 %v1715, 1.0
    %v1719 = vadd.f32 %v1717, 1.0
    %v1720 = vrcp.pop %v1718
    %v1721 = vmul.f32 1.0, %v1720
    %v1722 = vrcp.pop %v1719
    %v1723 = vmul.f32 1.0, %v1722
    %v1724 = vadd.f32 %v1707, %v395
    %v1725 = vmul.f32 %v1721, %v1724
    %v1726 = vadd.f32 %v1568, %v1725
    %v1727 = vtanh.pop %v1726
    %v1728 = vsub.f32 1.0, %v1723
    %v1729 = vmul.f32 %v1728, %v1727
    %v1730 = vmul.f32 %v1723, %v1564
    %v1731 = vadd.f32 %v1729, %v1730
    %1732 = vst [vmem:[#allocation7 + $0x38] sm:$0xff] %v1731
    %v1733 = vld [vmem:[#allocation7 + $0x38] sm:$0xff]
    %v1734 = vld [vmem:[#allocation7] sm:$0xff]
    %vm1735 = vcmask 523264
    %v1736 = vsel %vm1735, %v1733, %v1734
    %v1737 = vld [vmem:[%s4] sm:$0xff]
    %v1738 = vld [vmem:[%s4 + $0x8] sm:$0xff]
    %v1739 = vld [vmem:[%s4 + $0x10] sm:$0xff]
    %v1740 = vld [vmem:[%s4 + $0x18] sm:$0xff]
    %v1741 = vld [vmem:[%s4 + $0x20] sm:$0xff]
    %v1742 = vld [vmem:[%s4 + $0x28] sm:$0xff]
    %v1743 = vld [vmem:[%s4 + $0x30] sm:$0xff]
    %v1744 = vld [vmem:[%s4 + $0x38] sm:$0xff]
    %v1745 = vld [vmem:[%s4 + $0x40] sm:$0xff]
    %v1746 = vld [vmem:[%s4 + $0x48] sm:$0xff]
    %v1747 = vld [vmem:[%s4 + $0x50] sm:$0xff]
    %v1748 = vld [vmem:[%s4 + $0x58] sm:$0xff]
    %v1749 = vld [vmem:[%s4 + $0x60] sm:$0xff]
    %v1750 = vld [vmem:[%s4 + $0x68] sm:$0xff]
    %v1751 = vld [vmem:[%s4 + $0x70] sm:$0xff]
    %v1752 = vld [vmem:[%s4 + $0x78] sm:$0xff]
    %v1753 = vld [vmem:[#allocation3] sm:$0x1]
    %v1755 = vlaneseq
    %v1756 = vshrl.u32 %v1755, 7
    %v1757 = vsub.s32 0, %v1756
    %v1758 = vrot.slane %v1753, %v1757
    %1760 = vmatprep.subr.mxu0 0.0
    %1761 = vmatpush1.msra.mxu0 %v1737
    %1762 = vmatprep.subr.mxu0 0.0
    %1763 = vmatpush1.msra.mxu0 %v1738
    %1764 = vmatprep.subr.mxu0 0.0
    %1765 = vmatpush1.msra.mxu0 %v1739
    %1766 = vmatprep.subr.mxu0 0.0
    %1767 = vmatpush1.msra.mxu0 %v1740
    %1768 = vmatprep.subr.mxu0 0.0
    %1769 = vmatpush1.msra.mxu0 %v1741
    %1770 = vmatprep.subr.mxu0 0.0
    %1771 = vmatpush1.msra.mxu0 %v1742
    %1772 = vmatprep.subr.mxu0 0.0
    %1773 = vmatpush1.msra.mxu0 %v1743
    %1774 = vmatprep.subr.mxu0 0.0
    %1775 = vmatpush1.msra.mxu0 %v1744
    %1776 = vmatprep.subr.mxu0 0.0
    %1777 = vmatpush1.msra.mxu0 %v1745
    %1778 = vmatprep.subr.mxu0 0.0
    %1779 = vmatpush1.msra.mxu0 %v1746
    %1780 = vmatprep.subr.mxu0 0.0
    %1781 = vmatpush1.msra.mxu0 %v1747
    %1782 = vmatprep.subr.mxu0 0.0
    %1783 = vmatpush1.msra.mxu0 %v1748
    %1784 = vmatprep.subr.mxu0 0.0
    %1785 = vmatpush1.msra.mxu0 %v1749
    %1786 = vmatprep.subr.mxu0 0.0
    %1787 = vmatpush1.msra.mxu0 %v1750
    %1788 = vmatprep.subr.mxu0 0.0
    %1789 = vmatpush1.msra.mxu0 %v1751
    %1790 = vmatprep.subr.mxu0 0.0
    %1791 = vmatpush1.msra.mxu0 %v1752
    %1792 = vmatprep.subr.mxu0 0.0
    %1793 = vmatpush1.msra.mxu0 0.0
    %1794 = vmatprep.subr.mxu0 0.0
    %1795 = vmatpush1.msra.mxu0 0.0
    %1796 = vmatprep.subr.mxu0 0.0
    %1797 = vmatpush1.msra.mxu0 0.0
    %1798 = vmatprep.subr.mxu0 0.0
    %1799 = vmatpush1.msra.mxu0 0.0
    %1800 = vmatprep.subr.mxu0 0.0
    %1801 = vmatpush1.msra.mxu0 0.0
    %1802 = vmatprep.subr.mxu0 0.0
    %1803 = vmatpush1.msra.mxu0 0.0
    %1804 = vmatprep.subr.mxu0 0.0
    %1805 = vmatpush1.msra.mxu0 0.0
    %1806 = vmatprep.subr.mxu0 0.0
    %1807 = vmatpush1.msra.mxu0 0.0
    %1808 = vmatprep.subr.mxu0 0.0
    %1809 = vmatpush1.msra.mxu0 0.0
    %1810 = vmatprep.subr.mxu0 0.0
    %1811 = vmatpush1.msra.mxu0 0.0
    %1812 = vmatprep.subr.mxu0 0.0
    %1813 = vmatpush1.msra.mxu0 0.0
    %1814 = vmatprep.subr.mxu0 0.0
    %1815 = vmatpush1.msra.mxu0 0.0
    %1816 = vmatprep.subr.mxu0 0.0
    %1817 = vmatpush1.msra.mxu0 0.0
    %1818 = vmatprep.subr.mxu0 0.0
    %1819 = vmatpush1.msra.mxu0 0.0
    %1820 = vmatprep.subr.mxu0 0.0
    %1821 = vmatpush1.msra.mxu0 0.0
    %1822 = vmatprep.subr.mxu0 0.0
    %1823 = vmatpush1.msra.mxu0 0.0
    %1824 = vmatprep.mubr.f32.mxu0 0.0
    %1825 = vmatmul.mubr.f32.gmra.mrb[0].mxu0 %v1736
    %v1826 = vpop.f32.mrb[0].mxu0
    %v1827 = vadd.f32 %v1758, %v1826
    %v1828 = vpop.f32.mrb[0].mxu0
    %1829 = vdwg.mxu0
    %vm1830 = vcmask 7168
    %1831 = vst.msk [vmem:[%s7] sm:$0xff] %vm1830, %v1827
    // Predicated region
    $region30: #{tpu_custom_call.1} parent=1 // pred_check
      _
    $region31: #{tpu_custom_call.1} parent=1 // pred_check_branch
      %1833 = sbr.rel (0) target = $region33
    $region32: #{tpu_custom_call.1} parent=1 // pred_region
      %s1835 = ssub.s32 1024, 1024
      %1836 = vsyncadd [#allocation6], %s1835
      %s1837 = sshll.u32 [#allocation7], 4
      %s1838 = int_to_ptr.vmem [resolvable:$true] %s1837
      %1843 = dma.vmem_to_hbm [thread:$0]  %s1838, 1024, %s6, [#allocation6], 128, 128, 8
    $region33: #{tpu_custom_call.1} parent=1 // pred_fallthru
      _
    // Predicated region
    $region34: #{tpu_custom_call.1} parent=1 // pred_check
      _
    $region35: #{tpu_custom_call.1} parent=1 // pred_check_branch
      %1845 = sbr.rel (0) target = $region37
    $region36: #{tpu_custom_call.1} parent=1 // pred_region
      _
    $region37: #{tpu_custom_call.1} parent=1 // pred_fallthru
      _
    // Predicated region
    $region38: #{tpu_custom_call.1} parent=1 // pred_check
      _
    $region39: #{tpu_custom_call.1} parent=1 // pred_check_branch
      %1847 = sbr.rel (0) target = $region41
    $region40: #{tpu_custom_call.1} parent=1 // pred_region
      %1848 = dma.done [#allocation6], 1024
    $region41: #{tpu_custom_call.1} parent=1 // pred_fallthru
      _
    // Predicated region
    $region42: #{tpu_custom_call.1} parent=1 // pred_check
      _
    $region43: #{tpu_custom_call.1} parent=1 // pred_check_branch
      %1850 = sbr.rel (0) target = $region45
    $region44: #{tpu_custom_call.1} parent=1 // pred_region
      _
    $region45: #{tpu_custom_call.1} parent=1 // pred_fallthru
      _
    %1851 = vsyncpa [#allocation5], 1
    %1852 = vsyncpa [#allocation6], 1

</llo_original>
